<compile_context>
chip_gen: v7x
topology: tpu7x:2x2x1
jax: 0.10.0
libtpu: 0.0.40
codegen_flags: <defaults>
</compile_context>

<pallas_src>
import functools

import jax
import jax.numpy as jnp
import numpy as np
from jax import lax
from jax.experimental import pallas as pl
from jax.experimental.pallas import tpu as pltpu


def _rcab_kernel(x_ref, tw1_ref, b1_ref, tw2_ref, b2_ref,
                 wdp_ref, bd_ref, wub_ref, bub_ref,
                 out_ref, pad_ref, *, H, W, C, K, PAD):
    # Per grid step: one image.
    #   x_ref:   (H, W*C)  f32 lane-dense input
    #   tw1/tw2: (K, W*C, W*C) block-Toeplitz conv weights (compute dtype)
    #   b1/b2:   (1, W*C)  conv biases tiled over w (f32)
    #   wdp:     (W*C, Cr) pooled-down 1x1 conv (sum-over-w + 1/(H*W) folded in)
    #   bd:      (1, Cr)
    #   wub:     (Cr, W*C) up 1x1 conv with per-channel lane broadcast folded in
    #   bub:     (1, W*C)
    #   pad_ref: (Hpad, W*C) compute-dtype staging scratch, zero H-halos
    WC = W * C
    Hpad = pad_ref.shape[0]
    cdt = pad_ref.dtype

    x = x_ref[...]                                           # (H, WC) f32

    # Zero the aligned halo bands (rows PAD-1 and PAD+H provide the 'same'
    # padding along H). Done unconditionally each step: cheap, aligned slabs,
    # and safe under megacore grid sharding.
    pad_ref[0:PAD, :] = jnp.zeros((PAD, WC), cdt)
    pad_ref[PAD + H:Hpad, :] = jnp.zeros((Hpad - PAD - H, WC), cdt)

    def conv3x3(tw_ref, b_ref):
        # 'same' 3x3 conv = K row-shifted lane-dense matmuls against the
        # block-Toeplitz weights (contraction exactly W*C lanes).
        acc = None
        for kh in range(K):
            a = pad_ref[PAD - 1 + kh:PAD - 1 + kh + H, :]    # (H, WC) cdt
            part = jnp.dot(a, tw_ref[kh], preferred_element_type=jnp.float32)
            acc = part if acc is None else acc + part
        return acc + b_ref[...]                              # (H, WC) f32

    # ---- conv -> ReLU -> conv ----
    pad_ref[PAD:PAD + H, :] = x.astype(cdt)                  # aligned interior store
    h1 = jnp.maximum(conv3x3(tw1_ref, b1_ref), 0.0)
    pad_ref[PAD:PAD + H, :] = h1.astype(cdt)
    h2 = conv3x3(tw2_ref, b2_ref)                            # (H, WC) f32

    # ---- channel attention (per image), all in f32 ----
    row_sum = jnp.sum(h2, axis=0, keepdims=True)             # (1, WC) sublane reduce
    z = jnp.maximum(
        jnp.dot(row_sum, wdp_ref[...], preferred_element_type=jnp.float32)
        + bd_ref[...], 0.0)                                  # (1, Cr)
    s_lane = jax.nn.sigmoid(
        jnp.dot(z, wub_ref[...], preferred_element_type=jnp.float32)
        + bub_ref[...])                                      # (1, WC)

    # ---- scale + residual: one unmasked 256-lane store ----
    out_ref[...] = (h2 * s_lane + x).astype(out_ref.dtype)


def _toeplitz_weights(w, W_img, compute_dtype):
    """Expand HWIO (K,K,Cin,Cout) conv weights into K block-Toeplitz matrices
    of shape (K, W*Cin, W*Cout); the W-direction 'same' halo is absorbed by
    zeroing out-of-range taps, so the conv along W is one lane-dense matmul
    per row offset kh with contraction depth exactly W*Cin."""
    K, _, Cin, Cout = w.shape
    wa = jnp.arange(W_img)[:, None]          # input pixel index
    wb = jnp.arange(W_img)[None, :]          # output pixel index
    kw = wa - wb + (K // 2)                  # tap index; valid taps 0..K-1
    valid = (kw >= 0) & (kw < K)
    g = w[:, jnp.clip(kw, 0, K - 1)]         # (K, W, W, Cin, Cout)
    g = jnp.where(valid[None, :, :, None, None], g, 0.0)
    t = g.transpose(0, 1, 3, 2, 4).reshape(K, W_img * Cin, W_img * Cout)
    return t.astype(compute_dtype)


def prepare_rcab_params(params, H, W, *, compute_dtype=jnp.bfloat16):
    """One-time expansion of RCAB weights into lane-dense kernel constants.
    Call once per weight set so repeated forward calls (many RCABs per model)
    do not redo the O(K*W^2*C^2) expansion or retile biases."""
    w1, b1, w2, b2, wd, bd, wu, bu = params
    C = w1.shape[2]
    Cr = wd.shape[1]
    tw1 = _toeplitz_weights(jnp.asarray(w1, jnp.float32), W, compute_dtype)
    tw2 = _toeplitz_weights(jnp.asarray(w2, jnp.float32), W, compute_dtype)
    b1l = jnp.tile(jnp.asarray(b1, jnp.float32).reshape(1, C), (1, W))     # (1, W*C)
    b2l = jnp.tile(jnp.asarray(b2, jnp.float32).reshape(1, C), (1, W))
    # Pool-down weight: sum-over-w selector and 1/(H*W) folded in (exact tile).
    wdp = jnp.tile(jnp.asarray(wd, jnp.float32), (W, 1)) * (1.0 / (H * W))  # (W*C, Cr)
    bdr = jnp.asarray(bd, jnp.float32).reshape(1, Cr)
    # Up weight with per-channel lane broadcast folded in (exact tile).
    wub = jnp.tile(jnp.asarray(wu, jnp.float32), (1, W))                    # (Cr, W*C)
    bub = jnp.tile(jnp.asarray(bu, jnp.float32).reshape(1, C), (1, W))      # (1, W*C)
    return (tw1, b1l, tw2, b2l, wdp, bdr, wub, bub)


def rcab_rgb_pallas(x, prepared):
    """x: (N, H, W, C) float32 NHWC.  prepared: output of prepare_rcab_params.
    Returns (N, H, W, C) float32."""
    N, H, W, C = x.shape
    tw1, b1l, tw2, b2l, wdp, bdr, wub, bub = prepared
    K = tw1.shape[0]
    Cr = wdp.shape[1]
    WC = W * C
    cdt = tw1.dtype
    # Sublane alignment for the staging scratch (f32 tile 8 rows, bf16 16 rows).
    ALIGN = 8 if np.dtype(cdt).itemsize == 4 else 16
    PAD = ALIGN
    Hpad = ((PAD + H + 1 + ALIGN - 1) // ALIGN) * ALIGN

    x2d = x.reshape(N * H, WC)                               # lane-dense

    kernel = functools.partial(_rcab_kernel, H=H, W=W, C=C, K=K, PAD=PAD)
    grid_spec = pltpu.PrefetchScalarGridSpec(
        num_scalar_prefetch=0,
        grid=(N,),
        in_specs=[
            pl.BlockSpec((H, WC), lambda n: (n, 0)),         # x (per image)
            pl.BlockSpec((K, WC, WC), lambda n: (0, 0, 0)),  # tw1 (resident)
            pl.BlockSpec((1, WC), lambda n: (0, 0)),         # b1
            pl.BlockSpec((K, WC, WC), lambda n: (0, 0, 0)),  # tw2 (resident)
            pl.BlockSpec((1, WC), lambda n: (0, 0)),         # b2
            pl.BlockSpec((WC, Cr), lambda n: (0, 0)),        # wdp
            pl.BlockSpec((1, Cr), lambda n: (0, 0)),         # bd
            pl.BlockSpec((Cr, WC), lambda n: (0, 0)),        # wub
            pl.BlockSpec((1, WC), lambda n: (0, 0)),         # bub
        ],
        out_specs=pl.BlockSpec((H, WC), lambda n: (n, 0)),
        scratch_shapes=[pltpu.VMEM((Hpad, WC), cdt)],
    )
    out2d = pl.pallas_call(
        kernel,
        out_shape=jax.ShapeDtypeStruct((N * H, WC), x.dtype),
        grid_spec=grid_spec,
        compiler_params=pltpu.CompilerParams(
            dimension_semantics=("parallel",),
            vmem_limit_bytes=32 * 1024 * 1024,
        ),
    )(x2d, tw1, b1l, tw2, b2l, wdp, bdr, wub, bub)
    return out2d.reshape(N, H, W, C)


def rcab_rgb_reference(x, params, conv_dtype=jnp.float32):
    """Plain-JAX reference (NHWC), mirrors the PyTorch forward. conv_dtype
    controls the conv operand precision so the bf16 kernel path can be checked
    against a bf16-operand reference with a tight tolerance."""
    w1, b1, w2, b2, wd, bd, wu, bu = params
    dn = ("NHWC", "HWIO", "NHWC")

    def conv(a, w):
        return lax.conv_general_dilated(
            a.astype(conv_dtype), w.astype(conv_dtype), (1, 1), "SAME",
            dimension_numbers=dn, preferred_element_type=jnp.float32)

    h = jnp.maximum(conv(x, w1) + b1.reshape(1, 1, 1, -1), 0.0)
    h = conv(h, w2) + b2.reshape(1, 1, 1, -1)
    y = jnp.mean(h, axis=(1, 2), keepdims=True)
    z = jnp.maximum(jnp.einsum("nijc,cr->nijr", y, wd) + bd.reshape(1, 1, 1, -1), 0.0)
    s = jax.nn.sigmoid(jnp.einsum("nijr,rc->nijc", z, wu) + bu.reshape(1, 1, 1, -1))
    return h * s + x


if __name__ == "__main__":
    # Shapes consistent with RCAB_RGB(conv, n_feat=16, kernel_size=3, reduction=4)
    N, H, W, C = 2, 16, 16, 16
    K = 3
    reduction = 4
    Cr = C // reduction

    key = jax.random.PRNGKey(0)
    keys = jax.random.split(key, 9)
    scale = 0.1
    x  = jax.random.normal(keys[0], (N, H, W, C), jnp.float32)
    w1 = scale * jax.random.normal(keys[1], (K, K, C, C), jnp.float32)   # HWIO
    b1 = scale * jax.random.normal(keys[2], (1, C), jnp.float32)
    w2 = scale * jax.random.normal(keys[3], (K, K, C, C), jnp.float32)
    b2 = scale * jax.random.normal(keys[4], (1, C), jnp.float32)
    wd = scale * jax.random.normal(keys[5], (C, Cr), jnp.float32)        # 1x1 conv down
    bd = scale * jax.random.normal(keys[6], (1, Cr), jnp.float32)
    wu = scale * jax.random.normal(keys[7], (Cr, C), jnp.float32)        # 1x1 conv up
    bu = scale * jax.random.normal(keys[8], (1, C), jnp.float32)
    params = (w1, b1, w2, b2, wd, bd, wu, bu)

    run = jax.jit(rcab_rgb_pallas)

    # f32 conv operands: tight check against the f32 reference.
    prep_f32 = prepare_rcab_params(params, H, W, compute_dtype=jnp.float32)
    out_f32 = jax.block_until_ready(run(x, prep_f32))
    ref_f32 = rcab_rgb_reference(x, params, conv_dtype=jnp.float32)
    np.testing.assert_allclose(np.asarray(out_f32), np.asarray(ref_f32),
                               rtol=1e-3, atol=1e-3)

    # bf16 conv operands (MXU fast path): checked against a bf16-operand JAX
    # reference (same operand rounding, f32 accumulation) at a tight tolerance.
    prep_bf16 = prepare_rcab_params(params, H, W, compute_dtype=jnp.bfloat16)
    out_bf16 = jax.block_until_ready(run(x, prep_bf16))
    ref_bf16 = rcab_rgb_reference(x, params, conv_dtype=jnp.bfloat16)
    np.testing.assert_allclose(np.asarray(out_bf16), np.asarray(ref_bf16),
                               rtol=1e-2, atol=1e-2)

    print("KERNEL_OK")
</pallas_src>

<mosaic_0001>
module attributes {stable_mosaic.version = 11 : i64} {
  func.func @_rcab_kernel(%arg0: i32, %arg1: memref<16x256xf32, #tpu.memory_space<vmem>>, %arg2: memref<3x256x256xf32, #tpu.memory_space<vmem>>, %arg3: memref<1x256xf32, #tpu.memory_space<vmem>>, %arg4: memref<3x256x256xf32, #tpu.memory_space<vmem>>, %arg5: memref<1x256xf32, #tpu.memory_space<vmem>>, %arg6: memref<256x4xf32, #tpu.memory_space<vmem>>, %arg7: memref<1x4xf32, #tpu.memory_space<vmem>>, %arg8: memref<4x256xf32, #tpu.memory_space<vmem>>, %arg9: memref<1x256xf32, #tpu.memory_space<vmem>>, %arg10: memref<16x256xf32, #tpu.memory_space<vmem>>, %arg11: memref<32x256xf32, #tpu.memory_space<vmem>>) attributes {dimension_semantics = [#tpu.dimension_semantics<parallel>], iteration_bounds = array<i64: 2>, scalar_prefetch = 0 : i64, scratch_operands = 1 : i64, tpu.core_type = #tpu.core_type<tc>, window_params = [{transform_indices = @transform_0, window_bounds = array<i64: 16, 256>}, {pipeline_mode = #tpu.pipeline_mode<synchronous>, transform_indices = @transform_1, window_bounds = array<i64: 3, 256, 256>}, {pipeline_mode = #tpu.pipeline_mode<synchronous>, transform_indices = @transform_2, window_bounds = array<i64: 1, 256>}, {pipeline_mode = #tpu.pipeline_mode<synchronous>, transform_indices = @transform_3, window_bounds = array<i64: 3, 256, 256>}, {pipeline_mode = #tpu.pipeline_mode<synchronous>, transform_indices = @transform_4, window_bounds = array<i64: 1, 256>}, {pipeline_mode = #tpu.pipeline_mode<synchronous>, transform_indices = @transform_5, window_bounds = array<i64: 256, 4>}, {pipeline_mode = #tpu.pipeline_mode<synchronous>, transform_indices = @transform_6, window_bounds = array<i64: 1, 4>}, {pipeline_mode = #tpu.pipeline_mode<synchronous>, transform_indices = @transform_7, window_bounds = array<i64: 4, 256>}, {pipeline_mode = #tpu.pipeline_mode<synchronous>, transform_indices = @transform_8, window_bounds = array<i64: 1, 256>}, {transform_indices = @transform_9, window_bounds = array<i64: 16, 256>}]} {
    %c0 = arith.constant 0 : index
    %c0_0 = arith.constant 0 : index
    %0 = vector.load %arg1[%c0, %c0_0] : memref<16x256xf32, #tpu.memory_space<vmem>>, vector<16x256xf32>
    %cst = arith.constant 0.000000e+00 : f32
    %1 = vector.broadcast %cst : f32 to vector<8x256xf32>
    %c0_1 = arith.constant 0 : index
    %c0_2 = arith.constant 0 : index
    %2 = vector.load %arg11[%c0_1, %c0_2] : memref<32x256xf32, #tpu.memory_space<vmem>>, vector<8x256xf32>
    tpu.vector_store %arg11[%c0_1, %c0_2], %1 {strides = array<i32>} : memref<32x256xf32, #tpu.memory_space<vmem>>, vector<8x256xf32>,
    %cst_3 = arith.constant 0.000000e+00 : f32
    %3 = vector.broadcast %cst_3 : f32 to vector<8x256xf32>
    %c24 = arith.constant 24 : index
    %c0_4 = arith.constant 0 : index
    %4 = vector.load %arg11[%c24, %c0_4] : memref<32x256xf32, #tpu.memory_space<vmem>>, vector<8x256xf32>
    tpu.vector_store %arg11[%c24, %c0_4], %3 {strides = array<i32>} : memref<32x256xf32, #tpu.memory_space<vmem>>, vector<8x256xf32>,
    %c8 = arith.constant 8 : index
    %c0_5 = arith.constant 0 : index
    %5 = vector.load %arg11[%c8, %c0_5] : memref<32x256xf32, #tpu.memory_space<vmem>>, vector<16x256xf32>
    tpu.vector_store %arg11[%c8, %c0_5], %0 {strides = array<i32>} : memref<32x256xf32, #tpu.memory_space<vmem>>, vector<16x256xf32>,
    %c7 = arith.constant 7 : index
    %c0_6 = arith.constant 0 : index
    %6 = vector.load %arg11[%c7, %c0_6] : memref<32x256xf32, #tpu.memory_space<vmem>>, vector<16x256xf32>
    %c0_7 = arith.constant 0 : index
    %c0_8 = arith.constant 0 : index
    %c0_9 = arith.constant 0 : index
    %7 = vector.load %arg2[%c0_7, %c0_8, %c0_9] : memref<3x256x256xf32, #tpu.memory_space<vmem>>, vector<1x256x256xf32>
    %8 = vector.shape_cast %7 : vector<1x256x256xf32> to vector<256x256xf32>
    %cst_10 = arith.constant dense<0.000000e+00> : vector<16x256xf32>
    %9 = tpu.matmul %6, %8, %cst_10 {dimension_numbers = #tpu.dot_dimension_numbers<[1], [0], [0], [1], [0, 0, 1, 1], [], []>} : vector<16x256xf32>, vector<256x256xf32>, vector<16x256xf32> -> vector<16x256xf32>
    %c8_11 = arith.constant 8 : index
    %c0_12 = arith.constant 0 : index
    %10 = vector.load %arg11[%c8_11, %c0_12] : memref<32x256xf32, #tpu.memory_space<vmem>>, vector<16x256xf32>
    %c1 = arith.constant 1 : index
    %c0_13 = arith.constant 0 : index
    %c0_14 = arith.constant 0 : index
    %11 = vector.load %arg2[%c1, %c0_13, %c0_14] : memref<3x256x256xf32, #tpu.memory_space<vmem>>, vector<1x256x256xf32>
    %12 = vector.shape_cast %11 : vector<1x256x256xf32> to vector<256x256xf32>
    %cst_15 = arith.constant dense<0.000000e+00> : vector<16x256xf32>
    %13 = tpu.matmul %10, %12, %cst_15 {dimension_numbers = #tpu.dot_dimension_numbers<[1], [0], [0], [1], [0, 0, 1, 1], [], []>} : vector<16x256xf32>, vector<256x256xf32>, vector<16x256xf32> -> vector<16x256xf32>
    %14 = arith.addf %9, %13 : vector<16x256xf32>
    %c9 = arith.constant 9 : index
    %c0_16 = arith.constant 0 : index
    %15 = vector.load %arg11[%c9, %c0_16] : memref<32x256xf32, #tpu.memory_space<vmem>>, vector<16x256xf32>
    %c2 = arith.constant 2 : index
    %c0_17 = arith.constant 0 : index
    %c0_18 = arith.constant 0 : index
    %16 = vector.load %arg2[%c2, %c0_17, %c0_18] : memref<3x256x256xf32, #tpu.memory_space<vmem>>, vector<1x256x256xf32>
    %17 = vector.shape_cast %16 : vector<1x256x256xf32> to vector<256x256xf32>
    %cst_19 = arith.constant dense<0.000000e+00> : vector<16x256xf32>
    %18 = tpu.matmul %15, %17, %cst_19 {dimension_numbers = #tpu.dot_dimension_numbers<[1], [0], [0], [1], [0, 0, 1, 1], [], []>} : vector<16x256xf32>, vector<256x256xf32>, vector<16x256xf32> -> vector<16x256xf32>
    %19 = arith.addf %14, %18 : vector<16x256xf32>
    %c0_20 = arith.constant 0 : index
    %c0_21 = arith.constant 0 : index
    %20 = vector.load %arg3[%c0_20, %c0_21] : memref<1x256xf32, #tpu.memory_space<vmem>>, vector<1x256xf32>
    %21 = vector.broadcast %20 : vector<1x256xf32> to vector<16x256xf32>
    %22 = arith.addf %19, %21 : vector<16x256xf32>
    %cst_22 = arith.constant 0.000000e+00 : f32
    %23 = vector.broadcast %cst_22 : f32 to vector<16x256xf32>
    %24 = arith.maximumf %22, %23 : vector<16x256xf32>
    %c8_23 = arith.constant 8 : index
    %c0_24 = arith.constant 0 : index
    %25 = vector.load %arg11[%c8_23, %c0_24] : memref<32x256xf32, #tpu.memory_space<vmem>>, vector<16x256xf32>
    tpu.vector_store %arg11[%c8_23, %c0_24], %24 {strides = array<i32>} : memref<32x256xf32, #tpu.memory_space<vmem>>, vector<16x256xf32>,
    %c7_25 = arith.constant 7 : index
    %c0_26 = arith.constant 0 : index
    %26 = vector.load %arg11[%c7_25, %c0_26] : memref<32x256xf32, #tpu.memory_space<vmem>>, vector<16x256xf32>
    %c0_27 = arith.constant 0 : index
    %c0_28 = arith.constant 0 : index
    %c0_29 = arith.constant 0 : index
    %27 = vector.load %arg4[%c0_27, %c0_28, %c0_29] : memref<3x256x256xf32, #tpu.memory_space<vmem>>, vector<1x256x256xf32>
    %28 = vector.shape_cast %27 : vector<1x256x256xf32> to vector<256x256xf32>
    %cst_30 = arith.constant dense<0.000000e+00> : vector<16x256xf32>
    %29 = tpu.matmul %26, %28, %cst_30 {dimension_numbers = #tpu.dot_dimension_numbers<[1], [0], [0], [1], [0, 0, 1, 1], [], []>} : vector<16x256xf32>, vector<256x256xf32>, vector<16x256xf32> -> vector<16x256xf32>
    %c8_31 = arith.constant 8 : index
    %c0_32 = arith.constant 0 : index
    %30 = vector.load %arg11[%c8_31, %c0_32] : memref<32x256xf32, #tpu.memory_space<vmem>>, vector<16x256xf32>
    %c1_33 = arith.constant 1 : index
    %c0_34 = arith.constant 0 : index
    %c0_35 = arith.constant 0 : index
    %31 = vector.load %arg4[%c1_33, %c0_34, %c0_35] : memref<3x256x256xf32, #tpu.memory_space<vmem>>, vector<1x256x256xf32>
    %32 = vector.shape_cast %31 : vector<1x256x256xf32> to vector<256x256xf32>
    %cst_36 = arith.constant dense<0.000000e+00> : vector<16x256xf32>
    %33 = tpu.matmul %30, %32, %cst_36 {dimension_numbers = #tpu.dot_dimension_numbers<[1], [0], [0], [1], [0, 0, 1, 1], [], []>} : vector<16x256xf32>, vector<256x256xf32>, vector<16x256xf32> -> vector<16x256xf32>
    %34 = arith.addf %29, %33 : vector<16x256xf32>
    %c9_37 = arith.constant 9 : index
    %c0_38 = arith.constant 0 : index
    %35 = vector.load %arg11[%c9_37, %c0_38] : memref<32x256xf32, #tpu.memory_space<vmem>>, vector<16x256xf32>
    %c2_39 = arith.constant 2 : index
    %c0_40 = arith.constant 0 : index
    %c0_41 = arith.constant 0 : index
    %36 = vector.load %arg4[%c2_39, %c0_40, %c0_41] : memref<3x256x256xf32, #tpu.memory_space<vmem>>, vector<1x256x256xf32>
    %37 = vector.shape_cast %36 : vector<1x256x256xf32> to vector<256x256xf32>
    %cst_42 = arith.constant dense<0.000000e+00> : vector<16x256xf32>
    %38 = tpu.matmul %35, %37, %cst_42 {dimension_numbers = #tpu.dot_dimension_numbers<[1], [0], [0], [1], [0, 0, 1, 1], [], []>} : vector<16x256xf32>, vector<256x256xf32>, vector<16x256xf32> -> vector<16x256xf32>
    %39 = arith.addf %34, %38 : vector<16x256xf32>
    %c0_43 = arith.constant 0 : index
    %c0_44 = arith.constant 0 : index
    %40 = vector.load %arg5[%c0_43, %c0_44] : memref<1x256xf32, #tpu.memory_space<vmem>>, vector<1x256xf32>
    %41 = vector.broadcast %40 : vector<1x256xf32> to vector<16x256xf32>
    %42 = arith.addf %39, %41 : vector<16x256xf32>
    %cst_45 = arith.constant dense<0.000000e+00> : vector<256xf32>
    %43 = vector.multi_reduction <add>, %42, %cst_45 [0] : vector<16x256xf32> to vector<256xf32>
    %44 = vector.shape_cast %43 : vector<256xf32> to vector<1x256xf32>
    %c0_46 = arith.constant 0 : index
    %c0_47 = arith.constant 0 : index
    %45 = vector.load %arg6[%c0_46, %c0_47] : memref<256x4xf32, #tpu.memory_space<vmem>>, vector<256x4xf32>
    %cst_48 = arith.constant dense<0.000000e+00> : vector<1x4xf32>
    %46 = tpu.matmul %44, %45, %cst_48 {dimension_numbers = #tpu.dot_dimension_numbers<[1], [0], [0], [1], [0, 0, 1, 1], [], []>} : vector<1x256xf32>, vector<256x4xf32>, vector<1x4xf32> -> vector<1x4xf32>
    %c0_49 = arith.constant 0 : index
    %c0_50 = arith.constant 0 : index
    %47 = vector.load %arg7[%c0_49, %c0_50] : memref<1x4xf32, #tpu.memory_space<vmem>>, vector<1x4xf32>
    %48 = arith.addf %46, %47 : vector<1x4xf32>
    %cst_51 = arith.constant 0.000000e+00 : f32
    %49 = vector.broadcast %cst_51 : f32 to vector<1x4xf32>
    %50 = arith.maximumf %48, %49 : vector<1x4xf32>
    %c0_52 = arith.constant 0 : index
    %c0_53 = arith.constant 0 : index
    %51 = vector.load %arg8[%c0_52, %c0_53] : memref<4x256xf32, #tpu.memory_space<vmem>>, vector<4x256xf32>
    %cst_54 = arith.constant dense<0.000000e+00> : vector<1x256xf32>
    %52 = tpu.matmul %50, %51, %cst_54 {dimension_numbers = #tpu.dot_dimension_numbers<[1], [0], [0], [1], [0, 0, 1, 1], [], []>} : vector<1x4xf32>, vector<4x256xf32>, vector<1x256xf32> -> vector<1x256xf32>
    %c0_55 = arith.constant 0 : index
    %c0_56 = arith.constant 0 : index
    %53 = vector.load %arg9[%c0_55, %c0_56] : memref<1x256xf32, #tpu.memory_space<vmem>>, vector<1x256xf32>
    %54 = arith.addf %52, %53 : vector<1x256xf32>
    %55 = arith.negf %54 : vector<1x256xf32>
    %56 = math.exp %55 : vector<1x256xf32>
    %cst_57 = arith.constant 1.000000e+00 : f32
    %57 = vector.broadcast %cst_57 : f32 to vector<1x256xf32>
    %58 = arith.addf %57, %56 : vector<1x256xf32>
    %59 = arith.divf %57, %58 : vector<1x256xf32>
    %60 = vector.broadcast %59 : vector<1x256xf32> to vector<16x256xf32>
    %61 = arith.mulf %42, %60 : vector<16x256xf32>
    %62 = arith.addf %61, %0 : vector<16x256xf32>
    %c0_58 = arith.constant 0 : index
    %c0_59 = arith.constant 0 : index
    %63 = vector.load %arg10[%c0_58, %c0_59] : memref<16x256xf32, #tpu.memory_space<vmem>>, vector<16x256xf32>
    tpu.vector_store %arg10[%c0_58, %c0_59], %62 {strides = array<i32>} : memref<16x256xf32, #tpu.memory_space<vmem>>, vector<16x256xf32>,
    return
  }
  func.func @transform_0(%arg0: i32) -> (i32, i32) {
    %c0_i32 = arith.constant 0 : i32
    %c0_i32_0 = arith.constant 0 : i32
    return %arg0, %c0_i32 : i32, i32
  }
  func.func @transform_1(%arg0: i32) -> (i32, i32, i32) {
    %c0_i32 = arith.constant 0 : i32
    %c0_i32_0 = arith.constant 0 : i32
    %c0_i32_1 = arith.constant 0 : i32
    %c0_i32_2 = arith.constant 0 : i32
    return %c0_i32, %c0_i32_0, %c0_i32_1 : i32, i32, i32
  }
  func.func @transform_2(%arg0: i32) -> (i32, i32) {
    %c0_i32 = arith.constant 0 : i32
    %c0_i32_0 = arith.constant 0 : i32
    %c0_i32_1 = arith.constant 0 : i32
    return %c0_i32, %c0_i32_0 : i32, i32
  }
  func.func @transform_3(%arg0: i32) -> (i32, i32, i32) {
    %c0_i32 = arith.constant 0 : i32
    %c0_i32_0 = arith.constant 0 : i32
    %c0_i32_1 = arith.constant 0 : i32
    %c0_i32_2 = arith.constant 0 : i32
    return %c0_i32, %c0_i32_0, %c0_i32_1 : i32, i32, i32
  }
  func.func @transform_4(%arg0: i32) -> (i32, i32) {
    %c0_i32 = arith.constant 0 : i32
    %c0_i32_0 = arith.constant 0 : i32
    %c0_i32_1 = arith.constant 0 : i32
    return %c0_i32, %c0_i32_0 : i32, i32
  }
  func.func @transform_5(%arg0: i32) -> (i32, i32) {
    %c0_i32 = arith.constant 0 : i32
    %c0_i32_0 = arith.constant 0 : i32
    %c0_i32_1 = arith.constant 0 : i32
    return %c0_i32, %c0_i32_0 : i32, i32
  }
  func.func @transform_6(%arg0: i32) -> (i32, i32) {
    %c0_i32 = arith.constant 0 : i32
    %c0_i32_0 = arith.constant 0 : i32
    %c0_i32_1 = arith.constant 0 : i32
    return %c0_i32, %c0_i32_0 : i32, i32
  }
  func.func @transform_7(%arg0: i32) -> (i32, i32) {
    %c0_i32 = arith.constant 0 : i32
    %c0_i32_0 = arith.constant 0 : i32
    %c0_i32_1 = arith.constant 0 : i32
    return %c0_i32, %c0_i32_0 : i32, i32
  }
  func.func @transform_8(%arg0: i32) -> (i32, i32) {
    %c0_i32 = arith.constant 0 : i32
    %c0_i32_0 = arith.constant 0 : i32
    %c0_i32_1 = arith.constant 0 : i32
    return %c0_i32, %c0_i32_0 : i32, i32
  }
  func.func @transform_9(%arg0: i32) -> (i32, i32) {
    %c0_i32 = arith.constant 0 : i32
    %c0_i32_0 = arith.constant 0 : i32
    return %arg0, %c0_i32 : i32, i32
  }
}

</mosaic_0001>

<llo_original>
// kernel: rcab_rgb_pallas.1
$region0: #{rcab_rgb_pallas.1}
  #allocation0 [shape = 'u32[]', space=smem, size = 0x4, offset = 0x4, fixed_abs, tag = 'smem constant byte address 0x4 - core index']
  #allocation1 [shape = 'u32[144,128]{1,0:T(1,128)}', space=vmem, size = 0x12000, scoped, tag = 'internal scratch']
  #allocation2 [shape = 'f32[32,256]{1,0:T(8,128)}', space=vmem, size = 0x8000, scoped, tag = 'scratch operand']
  %s0 = inlined_call_operand.vmem [shape: f32[32,256], index: 0, kind: input, shape index: {}]
  %s1 = inlined_call_operand.hbm [shape: f32[3,256,256], index: 1, kind: input, shape index: {}]
  %s2 = inlined_call_operand.vmem [shape: f32[1,256], index: 2, kind: input, shape index: {}]
  %s3 = inlined_call_operand.hbm [shape: f32[3,256,256], index: 3, kind: input, shape index: {}]
  %s4 = inlined_call_operand.vmem [shape: f32[1,256], index: 4, kind: input, shape index: {}]
  %s5 = inlined_call_operand.vmem [shape: f32[256,4], index: 5, kind: input, shape index: {}]
  %s6 = inlined_call_operand.vmem [shape: f32[1,4], index: 6, kind: input, shape index: {}]
  %s7 = inlined_call_operand.vmem [shape: f32[4,256], index: 7, kind: input, shape index: {}]
  %s8 = inlined_call_operand.vmem [shape: f32[1,256], index: 8, kind: input, shape index: {}]
  %s9 = inlined_call_operand.vmem [shape: f32[32,256], index: 9, kind: output, shape index: {}]
  %s10 = sld [smem:[#allocation0]]
  $region77: #{rcab_rgb_pallas.1} parent=0
    _
  %s12 = ssub.s32 1, %s10
  %s13 = scalar_select 0, %s12, %s10
  $region1: #{rcab_rgb_pallas.1} parent=0
    #allocation3 [shape = 'u8[786432]{0}', space=vmem, size = 0xc0000, scoped, tag = 'input window, operand 1, single buffered']
    #allocation4 [shape = 's32[2]{0}', space=sflag, size = 0x8, scoped, tag = 'scoped memory for rcab_rgb_pallas.1']
    #allocation5 [shape = 'u8[786432]{0}', space=vmem, size = 0xc0000, scoped, tag = 'input window, operand 3, single buffered']
    #allocation6 [shape = 's32[1]{0}', space=sflag, size = 0x4, scoped, tag = 'scoped memory for rcab_rgb_pallas.1']
    %14 = vsyncpa [#allocation4], 0
    %15 = vsyncpa [#allocation6], 0
    loop: start=0, step=1, limit=4
    $region2: #{rcab_rgb_pallas.1} parent=1 // loop_pre_header
      _
    $region3: #{rcab_rgb_pallas.1} parent=1 // loop_header
      %s17 = sphi 0, %s21
      %p18 = scmp.ge.s32.totalorder %s17, 4
      %s27 = sphi 0, %s29
      %s30 = sphi 0, %s27
      %s31 = sphi 0, %s30
      %s47 = sphi 0, %s31
      %s51 = sphi 0, %s51
      %s53 = sphi 0, %s51
      %s54 = sphi 0, %s53
      %s68 = sphi 0, %s54
      %s72 = sphi 0, %s72
      %s74 = sphi 0, %s72
      %s75 = sphi 0, %s74
      %s89 = sphi 0, %s75
      %s93 = sphi 0, %s93
      %s95 = sphi 0, %s93
      %s96 = sphi 0, %s95
      %s110 = sphi 0, %s96
      %s114 = sphi 0, %s114
      %s116 = sphi 0, %s114
      %s117 = sphi 0, %s116
      %s131 = sphi 0, %s117
      %s135 = sphi 0, %s135
      %s137 = sphi 0, %s135
      %s138 = sphi 0, %s137
      %s152 = sphi 0, %s138
      %s156 = sphi 0, %s156
      %s158 = sphi 0, %s156
      %s159 = sphi 0, %s158
      %s173 = sphi 0, %s159
      %s177 = sphi 0, %s177
      %s179 = sphi 0, %s177
      %s180 = sphi 0, %s179
      %s194 = sphi 0, %s180
      %s198 = sphi 0, %s198
      %s200 = sphi 0, %s198
      %s201 = sphi 0, %s200
      %s215 = sphi 0, %s201
      %s221 = sphi 0, %s223
      %s224 = sphi 0, %s221
      %s225 = sphi 0, %s224
      %s241 = sphi 0, %s225
    $region4: #{rcab_rgb_pallas.1} parent=1 // loop_header_branch
      %20 = sbr.rel (%p18) target = $region8
    $region5: #{rcab_rgb_pallas.1} parent=1 // loop_body
      %s22 = ssub.s32 %s17, 1
      %s23 = ssub.s32 %s17, 2
      %s24 = sadd.s32 %s17, 1
      %s25 = ssub.s32 %s17, %s24
      %p26 = scmp.eq.s32.totalorder %s25, 0
      %s28 = sadd.s32 %s27, 1
      %s29 = scalar_select %p26, %s27, %s28
      %p32 = pneg %p26
      %p33 = scmp.eq.s32.totalorder %s17, 1
      %p34 = por %p32, %p33
      %p35 = scmp.ne.s32.totalorder %s27, %s30
      %p36 = scmp.eq.s32.totalorder %s17, 0
      %p37 = por %p35, %p36
      %p38 = scmp.ne.s32.totalorder %s27, %s30
      %p39 = scmp.eq.s32.totalorder %s22, 1
      %p40 = por %p38, %p39
      %p41 = scmp.ne.s32.totalorder %s30, %s31
      %p42 = scmp.eq.s32.totalorder %s22, 0
      %p43 = por %p41, %p42
      %p44 = scmp.ne.s32.totalorder %s30, %s31
      %p45 = scmp.eq.s32.totalorder %s23, 1
      %p46 = por %p44, %p45
      %p48 = scmp.ne.s32.totalorder %s31, %s47
      %p49 = scmp.eq.s32.totalorder %s23, 0
      %p50 = por %p48, %p49
      %s52 = sadd.s32 %s51, 1
      %p55 = scmp.eq.s32.totalorder %s17, 1
      %p56 = scmp.ne.s32.totalorder %s51, %s53
      %p57 = scmp.eq.s32.totalorder %s17, 0
      %p58 = por %p56, %p57
      %p59 = scmp.ne.s32.totalorder %s51, %s53
      %p60 = scmp.eq.s32.totalorder %s22, 1
      %p61 = por %p59, %p60
      %p62 = scmp.ne.s32.totalorder %s53, %s54
      %p63 = scmp.eq.s32.totalorder %s22, 0
      %p64 = por %p62, %p63
      %p65 = scmp.ne.s32.totalorder %s53, %s54
      %p66 = scmp.eq.s32.totalorder %s23, 1
      %p67 = por %p65, %p66
      %p69 = scmp.ne.s32.totalorder %s54, %s68
      %p70 = scmp.eq.s32.totalorder %s23, 0
      %p71 = por %p69, %p70
      %s73 = sadd.s32 %s72, 1
      %p76 = scmp.eq.s32.totalorder %s17, 1
      %p77 = scmp.ne.s32.totalorder %s72, %s74
      %p78 = scmp.eq.s32.totalorder %s17, 0
      %p79 = por %p77, %p78
      %p80 = scmp.ne.s32.totalorder %s72, %s74
      %p81 = scmp.eq.s32.totalorder %s22, 1
      %p82 = por %p80, %p81
      %p83 = scmp.ne.s32.totalorder %s74, %s75
      %p84 = scmp.eq.s32.totalorder %s22, 0
      %p85 = por %p83, %p84
      %p86 = scmp.ne.s32.totalorder %s74, %s75
      %p87 = scmp.eq.s32.totalorder %s23, 1
      %p88 = por %p86, %p87
      %p90 = scmp.ne.s32.totalorder %s75, %s89
      %p91 = scmp.eq.s32.totalorder %s23, 0
      %p92 = por %p90, %p91
      %s94 = sadd.s32 %s93, 1
      %p97 = scmp.eq.s32.totalorder %s17, 1
      %p98 = scmp.ne.s32.totalorder %s93, %s95
      %p99 = scmp.eq.s32.totalorder %s17, 0
      %p100 = por %p98, %p99
      %p101 = scmp.ne.s32.totalorder %s93, %s95
      %p102 = scmp.eq.s32.totalorder %s22, 1
      %p103 = por %p101, %p102
      %p104 = scmp.ne.s32.totalorder %s95, %s96
      %p105 = scmp.eq.s32.totalorder %s22, 0
      %p106 = por %p104, %p105
      %p107 = scmp.ne.s32.totalorder %s95, %s96
      %p108 = scmp.eq.s32.totalorder %s23, 1
      %p109 = por %p107, %p108
      %p111 = scmp.ne.s32.totalorder %s96, %s110
      %p112 = scmp.eq.s32.totalorder %s23, 0
      %p113 = por %p111, %p112
      %s115 = sadd.s32 %s114, 1
      %p118 = scmp.eq.s32.totalorder %s17, 1
      %p119 = scmp.ne.s32.totalorder %s114, %s116
      %p120 = scmp.eq.s32.totalorder %s17, 0
      %p121 = por %p119, %p120
      %p122 = scmp.ne.s32.totalorder %s114, %s116
      %p123 = scmp.eq.s32.totalorder %s22, 1
      %p124 = por %p122, %p123
      %p125 = scmp.ne.s32.totalorder %s116, %s117
      %p126 = scmp.eq.s32.totalorder %s22, 0
      %p127 = por %p125, %p126
      %p128 = scmp.ne.s32.totalorder %s116, %s117
      %p129 = scmp.eq.s32.totalorder %s23, 1
      %p130 = por %p128, %p129
      %p132 = scmp.ne.s32.totalorder %s117, %s131
      %p133 = scmp.eq.s32.totalorder %s23, 0
      %p134 = por %p132, %p133
      %s136 = sadd.s32 %s135, 1
      %p139 = scmp.eq.s32.totalorder %s17, 1
      %p140 = scmp.ne.s32.totalorder %s135, %s137
      %p141 = scmp.eq.s32.totalorder %s17, 0
      %p142 = por %p140, %p141
      %p143 = scmp.ne.s32.totalorder %s135, %s137
      %p144 = scmp.eq.s32.totalorder %s22, 1
      %p145 = por %p143, %p144
      %p146 = scmp.ne.s32.totalorder %s137, %s138
      %p147 = scmp.eq.s32.totalorder %s22, 0
      %p148 = por %p146, %p147
      %p149 = scmp.ne.s32.totalorder %s137, %s138
      %p150 = scmp.eq.s32.totalorder %s23, 1
      %p151 = por %p149, %p150
      %p153 = scmp.ne.s32.totalorder %s138, %s152
      %p154 = scmp.eq.s32.totalorder %s23, 0
      %p155 = por %p153, %p154
      %s157 = sadd.s32 %s156, 1
      %p160 = scmp.eq.s32.totalorder %s17, 1
      %p161 = scmp.ne.s32.totalorder %s156, %s158
      %p162 = scmp.eq.s32.totalorder %s17, 0
      %p163 = por %p161, %p162
      %p164 = scmp.ne.s32.totalorder %s156, %s158
      %p165 = scmp.eq.s32.totalorder %s22, 1
      %p166 = por %p164, %p165
      %p167 = scmp.ne.s32.totalorder %s158, %s159
      %p168 = scmp.eq.s32.totalorder %s22, 0
      %p169 = por %p167, %p168
      %p170 = scmp.ne.s32.totalorder %s158, %s159
      %p171 = scmp.eq.s32.totalorder %s23, 1
      %p172 = por %p170, %p171
      %p174 = scmp.ne.s32.totalorder %s159, %s173
      %p175 = scmp.eq.s32.totalorder %s23, 0
      %p176 = por %p174, %p175
      %s178 = sadd.s32 %s177, 1
      %p181 = scmp.eq.s32.totalorder %s17, 1
      %p182 = scmp.ne.s32.totalorder %s177, %s179
      %p183 = scmp.eq.s32.totalorder %s17, 0
      %p184 = por %p182, %p183
      %p185 = scmp.ne.s32.totalorder %s177, %s179
      %p186 = scmp.eq.s32.totalorder %s22, 1
      %p187 = por %p185, %p186
      %p188 = scmp.ne.s32.totalorder %s179, %s180
      %p189 = scmp.eq.s32.totalorder %s22, 0
      %p190 = por %p188, %p189
      %p191 = scmp.ne.s32.totalorder %s179, %s180
      %p192 = scmp.eq.s32.totalorder %s23, 1
      %p193 = por %p191, %p192
      %p195 = scmp.ne.s32.totalorder %s180, %s194
      %p196 = scmp.eq.s32.totalorder %s23, 0
      %p197 = por %p195, %p196
      %s199 = sadd.s32 %s198, 1
      %p202 = scmp.eq.s32.totalorder %s17, 1
      %p203 = scmp.ne.s32.totalorder %s198, %s200
      %p204 = scmp.eq.s32.totalorder %s17, 0
      %p205 = por %p203, %p204
      %p206 = scmp.ne.s32.totalorder %s198, %s200
      %p207 = scmp.eq.s32.totalorder %s22, 1
      %p208 = por %p206, %p207
      %p209 = scmp.ne.s32.totalorder %s200, %s201
      %p210 = scmp.eq.s32.totalorder %s22, 0
      %p211 = por %p209, %p210
      %p212 = scmp.ne.s32.totalorder %s200, %s201
      %p213 = scmp.eq.s32.totalorder %s23, 1
      %p214 = por %p212, %p213
      %p216 = scmp.ne.s32.totalorder %s201, %s215
      %p217 = scmp.eq.s32.totalorder %s23, 0
      %p218 = por %p216, %p217
      %s219 = ssub.s32 %s17, %s24
      %p220 = scmp.eq.s32.totalorder %s219, 0
      %s222 = sadd.s32 %s221, 1
      %s223 = scalar_select %p220, %s221, %s222
      %p226 = pneg %p220
      %p227 = scmp.eq.s32.totalorder %s17, 1
      %p228 = por %p226, %p227
      %p229 = scmp.ne.s32.totalorder %s221, %s224
      %p230 = scmp.eq.s32.totalorder %s17, 0
      %p231 = por %p229, %p230
      %p232 = scmp.ne.s32.totalorder %s221, %s224
      %p233 = scmp.eq.s32.totalorder %s22, 1
      %p234 = por %p232, %p233
      %p235 = scmp.ne.s32.totalorder %s224, %s225
      %p236 = scmp.eq.s32.totalorder %s22, 0
      %p237 = por %p235, %p236
      %p238 = scmp.ne.s32.totalorder %s224, %s225
      %p239 = scmp.eq.s32.totalorder %s23, 1
      %p240 = por %p238, %p239
      %p242 = scmp.ne.s32.totalorder %s225, %s241
      %p243 = scmp.eq.s32.totalorder %s23, 0
      %p244 = por %p242, %p243
      %p245 = scmp.le.s32.totalorder 1, %s17
      %p246 = scmp.lt.s32.totalorder %s17, 3
      %p247 = pnand %p245, %p246
      %p248 = pneg %p247
      // Predicated region
      $region9: #{rcab_rgb_pallas.1} parent=5 // pred_check
        _
      $region10: #{rcab_rgb_pallas.1} parent=5 // pred_check_branch
        %250 = sbr.rel (%p247) target = $region12
      $region11: #{rcab_rgb_pallas.1} parent=5 // pred_region
        %s251 = ssub.s32 %s17, 1
        // Predicated region
        $region13: #{rcab_rgb_pallas.1} parent=11 // pred_check
          %p252 = pneg %p64
        $region14: #{rcab_rgb_pallas.1} parent=11 // pred_check_branch
          %254 = sbr.rel (%p252) target = $region16
        $region15: #{rcab_rgb_pallas.1} parent=11 // pred_region
          %s256 = ssub.s32 24576, 24576
          %257 = vsyncadd [#allocation4], %s256
          %s258 = sshll.u32 [#allocation3], 4
          %s259 = int_to_ptr.vmem [resolvable:$true] %s258
          %264 = dma.hbm_to_vmem [thread:$0]  %s1, 24576, %s259, [#allocation4], 256, 256, 16
        $region16: #{rcab_rgb_pallas.1} parent=11 // pred_fallthru
          _
        // Predicated region
        $region17: #{rcab_rgb_pallas.1} parent=11 // pred_check
          %p265 = pneg %p85
        $region18: #{rcab_rgb_pallas.1} parent=11 // pred_check_branch
          %267 = sbr.rel (%p265) target = $region20
        $region19: #{rcab_rgb_pallas.1} parent=11 // pred_region
          _
        $region20: #{rcab_rgb_pallas.1} parent=11 // pred_fallthru
          _
        // Predicated region
        $region21: #{rcab_rgb_pallas.1} parent=11 // pred_check
          %p268 = pneg %p106
        $region22: #{rcab_rgb_pallas.1} parent=11 // pred_check_branch
          %270 = sbr.rel (%p268) target = $region24
        $region23: #{rcab_rgb_pallas.1} parent=11 // pred_region
          %s272 = ssub.s32 24576, 24576
          %273 = vsyncadd [#allocation6], %s272
          %s274 = sshll.u32 [#allocation5], 4
          %s275 = int_to_ptr.vmem [resolvable:$true] %s274
          %280 = dma.hbm_to_vmem [thread:$0]  %s3, 24576, %s275, [#allocation6], 256, 256, 16
        $region24: #{rcab_rgb_pallas.1} parent=11 // pred_fallthru
          _
        // Predicated region
        $region25: #{rcab_rgb_pallas.1} parent=11 // pred_check
          %p281 = pneg %p127
        $region26: #{rcab_rgb_pallas.1} parent=11 // pred_check_branch
          %283 = sbr.rel (%p281) target = $region28
        $region27: #{rcab_rgb_pallas.1} parent=11 // pred_region
          _
        $region28: #{rcab_rgb_pallas.1} parent=11 // pred_fallthru
          _
        // Predicated region
        $region29: #{rcab_rgb_pallas.1} parent=11 // pred_check
          %p284 = pneg %p148
        $region30: #{rcab_rgb_pallas.1} parent=11 // pred_check_branch
          %286 = sbr.rel (%p284) target = $region32
        $region31: #{rcab_rgb_pallas.1} parent=11 // pred_region
          _
        $region32: #{rcab_rgb_pallas.1} parent=11 // pred_fallthru
          _
        // Predicated region
        $region33: #{rcab_rgb_pallas.1} parent=11 // pred_check
          %p287 = pneg %p169
        $region34: #{rcab_rgb_pallas.1} parent=11 // pred_check_branch
          %289 = sbr.rel (%p287) target = $region36
        $region35: #{rcab_rgb_pallas.1} parent=11 // pred_region
          _
        $region36: #{rcab_rgb_pallas.1} parent=11 // pred_fallthru
          _
        // Predicated region
        $region37: #{rcab_rgb_pallas.1} parent=11 // pred_check
          %p290 = pneg %p190
        $region38: #{rcab_rgb_pallas.1} parent=11 // pred_check_branch
          %292 = sbr.rel (%p290) target = $region40
        $region39: #{rcab_rgb_pallas.1} parent=11 // pred_region
          _
        $region40: #{rcab_rgb_pallas.1} parent=11 // pred_fallthru
          _
        // Predicated region
        $region41: #{rcab_rgb_pallas.1} parent=11 // pred_check
          %p293 = pneg %p211
        $region42: #{rcab_rgb_pallas.1} parent=11 // pred_check_branch
          %295 = sbr.rel (%p293) target = $region44
        $region43: #{rcab_rgb_pallas.1} parent=11 // pred_region
          _
        $region44: #{rcab_rgb_pallas.1} parent=11 // pred_fallthru
          _
      $region12: #{rcab_rgb_pallas.1} parent=5 // pred_fallthru
        _
      %p296 = scmp.lt.s32.totalorder %s17, 2
      // Predicated region
      $region45: #{rcab_rgb_pallas.1} parent=5 // pred_check
        %p297 = pneg %p296
      $region46: #{rcab_rgb_pallas.1} parent=5 // pred_check_branch
        %299 = sbr.rel (%p297) target = $region48
      $region47: #{rcab_rgb_pallas.1} parent=5 // pred_region
        // Predicated region
        $region49: #{rcab_rgb_pallas.1} parent=47 // pred_check
          %p300 = pneg %p37
        $region50: #{rcab_rgb_pallas.1} parent=47 // pred_check_branch
          %302 = sbr.rel (%p300) target = $region52
        $region51: #{rcab_rgb_pallas.1} parent=47 // pred_region
          %s303 = smul.u32 2, %s17
          %p304 = scmp.lt.s32.totalorder %s303, 3
          %s305 = scalar_select %p304, %s303, 3
          %s306 = smul.addr %s305, 2
          %s307 = smul.addr %s306, 8
          %s308 = scalar_lea.vmem %s0, %s307
          %s309 = smul.u32 2, %s17
        $region52: #{rcab_rgb_pallas.1} parent=47 // pred_fallthru
          _
      $region48: #{rcab_rgb_pallas.1} parent=5 // pred_fallthru
        _
      %p310 = scmp.le.s32.totalorder 1, %s17
      %p311 = scmp.lt.s32.totalorder %s17, 3
      %p312 = pnand %p310, %p311
      %p313 = pneg %p312
      // Predicated region
      $region53: #{rcab_rgb_pallas.1} parent=5 // pred_check
        _
      $region54: #{rcab_rgb_pallas.1} parent=5 // pred_check_branch
        %315 = sbr.rel (%p312) target = $region56
      $region55: #{rcab_rgb_pallas.1} parent=5 // pred_region
        %s316 = ssub.s32 %s17, 1
        // Predicated region
        $region57: #{rcab_rgb_pallas.1} parent=55 // pred_check
          %p317 = pneg %p64
        $region58: #{rcab_rgb_pallas.1} parent=55 // pred_check_branch
          %319 = sbr.rel (%p317) target = $region60
        $region59: #{rcab_rgb_pallas.1} parent=55 // pred_region
          %320 = dma.done [#allocation4], 24576
        $region60: #{rcab_rgb_pallas.1} parent=55 // pred_fallthru
          _
        // Predicated region
        $region61: #{rcab_rgb_pallas.1} parent=55 // pred_check
          %p321 = pneg %p106
        $region62: #{rcab_rgb_pallas.1} parent=55 // pred_check_branch
          %323 = sbr.rel (%p321) target = $region64
        $region63: #{rcab_rgb_pallas.1} parent=55 // pred_region
          %324 = dma.done [#allocation6], 24576
        $region64: #{rcab_rgb_pallas.1} parent=55 // pred_fallthru
          _
        %s325 = smul.u32 2, %s22
        %p326 = scmp.lt.s32.totalorder %s325, 3
        %s327 = scalar_select %p326, %s325, 3
        %s328 = smul.addr %s327, 2
        %s329 = smul.addr %s328, 8
        %s330 = scalar_lea.vmem %s0, %s329
        %p331 = pneg %p43
        %p332 = pneg %p40
        %p333 = pneg %p64
        %p334 = pneg %p61
        %p335 = pneg %p85
        %p336 = pneg %p82
        %p337 = pneg %p106
        %p338 = pneg %p103
        %p339 = pneg %p127
        %p340 = pneg %p124
        %p341 = pneg %p148
        %p342 = pneg %p145
        %p343 = pneg %p169
        %p344 = pneg %p166
        %p345 = pneg %p190
        %p346 = pneg %p187
        %p347 = pneg %p211
        %p348 = pneg %p208
        %p349 = pneg %p237
        %p350 = pneg %p234
        %s351 = smul.u32 2, %s22
        %p352 = scmp.lt.s32.totalorder %s351, 3
        %s353 = scalar_select %p352, %s351, 3
        %s354 = smul.addr %s353, 2
        %s355 = smul.addr %s354, 8
        %s356 = scalar_lea.vmem %s9, %s355
        %s357 = smul.u32 2, %s22
        %p358 = scmp.lt.s32.totalorder %s357, 3
        %s359 = scalar_select %p358, %s357, 3
        %s360 = smul.addr %s359, 2
        %s361 = smul.addr %s360, 8
        %s362 = scalar_lea.vmem %s0, %s361
        %s363 = smul.u32 2, %s22
        %s364 = smul.u32 2, %s22
        %p365 = scmp.lt.s32.totalorder %s364, 3
        %s366 = scalar_select %p365, %s364, 3
        %s367 = smul.addr %s366, 2
        %s368 = smul.addr %s367, 8
        %s369 = scalar_lea.vmem %s9, %s368
        %s370 = smul.u32 2, %s22
        %v371 = vld [vmem:[%s362] sm:$0xff]
        %v372 = vld [vmem:[%s362 + $0x8] sm:$0xff]
        %v373 = vld [vmem:[%s362 + $0x10] sm:$0xff]
        %v374 = vld [vmem:[%s362 + $0x18] sm:$0xff]
        %375 = vst [vmem:[#allocation2] sm:$0xff] 0.0
        %376 = vst [vmem:[#allocation2 + $0x8] sm:$0xff] 0.0
        %377 = vst [vmem:[#allocation2 + $0x30] sm:$0xff] 0.0
        %378 = vst [vmem:[#allocation2 + $0x38] sm:$0xff] 0.0
        %379 = vst [vmem:[#allocation2 + $0x10] sm:$0xff] %v371
        %380 = vst [vmem:[#allocation2 + $0x18] sm:$0xff] %v372
        %381 = vst [vmem:[#allocation2 + $0x20] sm:$0xff] %v373
        %382 = vst [vmem:[#allocation2 + $0x28] sm:$0xff] %v374
        %v383 = vld [vmem:[#allocation2] sm:$0x80]
        %v384 = vld [vmem:[#allocation2 + $0x8] sm:$0x80]
        %v385 = vld [vmem:[#allocation2 + $0x10] sm:$0xff]
        %v386 = vld [vmem:[#allocation2 + $0x18] sm:$0xff]
        %v387 = vld [vmem:[#allocation2 + $0x20] sm:$0x7f]
        %v388 = vld [vmem:[#allocation2 + $0x28] sm:$0x7f]
        %v389 = vld [vmem:[#allocation3] sm:$0xff]
        %v390 = vld [vmem:[#allocation3 + $0x8] sm:$0xff]
        %v391 = vld [vmem:[#allocation3 + $0x10] sm:$0xff]
        %v392 = vld [vmem:[#allocation3 + $0x18] sm:$0xff]
        %v393 = vld [vmem:[#allocation3 + $0x20] sm:$0xff]
        %v394 = vld [vmem:[#allocation3 + $0x28] sm:$0xff]
        %v395 = vld [vmem:[#allocation3 + $0x30] sm:$0xff]
        %v396 = vld [vmem:[#allocation3 + $0x38] sm:$0xff]
        %v397 = vld [vmem:[#allocation3 + $0x40] sm:$0xff]
        %v398 = vld [vmem:[#allocation3 + $0x48] sm:$0xff]
        %v399 = vld [vmem:[#allocation3 + $0x50] sm:$0xff]
        %v400 = vld [vmem:[#allocation3 + $0x58] sm:$0xff]
        %v401 = vld [vmem:[#allocation3 + $0x60] sm:$0xff]
        %v402 = vld [vmem:[#allocation3 + $0x68] sm:$0xff]
        %v403 = vld [vmem:[#allocation3 + $0x70] sm:$0xff]
        %v404 = vld [vmem:[#allocation3 + $0x78] sm:$0xff]
        %v405 = vld [vmem:[#allocation3 + $0x80] sm:$0xff]
        %v406 = vld [vmem:[#allocation3 + $0x88] sm:$0xff]
        %v407 = vld [vmem:[#allocation3 + $0x90] sm:$0xff]
        %v408 = vld [vmem:[#allocation3 + $0x98] sm:$0xff]
        %v409 = vld [vmem:[#allocation3 + $0xa0] sm:$0xff]
        %v410 = vld [vmem:[#allocation3 + $0xa8] sm:$0xff]
        %v411 = vld [vmem:[#allocation3 + $0xb0] sm:$0xff]
        %v412 = vld [vmem:[#allocation3 + $0xb8] sm:$0xff]
        %v413 = vld [vmem:[#allocation3 + $0xc0] sm:$0xff]
        %v414 = vld [vmem:[#allocation3 + $0xc8] sm:$0xff]
        %v415 = vld [vmem:[#allocation3 + $0xd0] sm:$0xff]
        %v416 = vld [vmem:[#allocation3 + $0xd8] sm:$0xff]
        %v417 = vld [vmem:[#allocation3 + $0xe0] sm:$0xff]
        %v418 = vld [vmem:[#allocation3 + $0xe8] sm:$0xff]
        %v419 = vld [vmem:[#allocation3 + $0xf0] sm:$0xff]
        %v420 = vld [vmem:[#allocation3 + $0xf8] sm:$0xff]
        %v421 = vld [vmem:[#allocation3 + $0x100] sm:$0xff]
        %v422 = vld [vmem:[#allocation3 + $0x108] sm:$0xff]
        %v423 = vld [vmem:[#allocation3 + $0x110] sm:$0xff]
        %v424 = vld [vmem:[#allocation3 + $0x118] sm:$0xff]
        %v425 = vld [vmem:[#allocation3 + $0x120] sm:$0xff]
        %v426 = vld [vmem:[#allocation3 + $0x128] sm:$0xff]
        %v427 = vld [vmem:[#allocation3 + $0x130] sm:$0xff]
        %v428 = vld [vmem:[#allocation3 + $0x138] sm:$0xff]
        %v429 = vld [vmem:[#allocation3 + $0x140] sm:$0xff]
        %v430 = vld [vmem:[#allocation3 + $0x148] sm:$0xff]
        %v431 = vld [vmem:[#allocation3 + $0x150] sm:$0xff]
        %v432 = vld [vmem:[#allocation3 + $0x158] sm:$0xff]
        %v433 = vld [vmem:[#allocation3 + $0x160] sm:$0xff]
        %v434 = vld [vmem:[#allocation3 + $0x168] sm:$0xff]
        %v435 = vld [vmem:[#allocation3 + $0x170] sm:$0xff]
        %v436 = vld [vmem:[#allocation3 + $0x178] sm:$0xff]
        %v437 = vld [vmem:[#allocation3 + $0x180] sm:$0xff]
        %v438 = vld [vmem:[#allocation3 + $0x188] sm:$0xff]
        %v439 = vld [vmem:[#allocation3 + $0x190] sm:$0xff]
        %v440 = vld [vmem:[#allocation3 + $0x198] sm:$0xff]
        %v441 = vld [vmem:[#allocation3 + $0x1a0] sm:$0xff]
        %v442 = vld [vmem:[#allocation3 + $0x1a8] sm:$0xff]
        %v443 = vld [vmem:[#allocation3 + $0x1b0] sm:$0xff]
        %v444 = vld [vmem:[#allocation3 + $0x1b8] sm:$0xff]
        %v445 = vld [vmem:[#allocation3 + $0x1c0] sm:$0xff]
        %v446 = vld [vmem:[#allocation3 + $0x1c8] sm:$0xff]
        %v447 = vld [vmem:[#allocation3 + $0x1d0] sm:$0xff]
        %v448 = vld [vmem:[#allocation3 + $0x1d8] sm:$0xff]
        %v449 = vld [vmem:[#allocation3 + $0x1e0] sm:$0xff]
        %v450 = vld [vmem:[#allocation3 + $0x1e8] sm:$0xff]
        %v451 = vld [vmem:[#allocation3 + $0x1f0] sm:$0xff]
        %v452 = vld [vmem:[#allocation3 + $0x1f8] sm:$0xff]
        %v453 = vld [vmem:[#allocation2 + $0x20] sm:$0xff]
        %v454 = vld [vmem:[#allocation2 + $0x28] sm:$0xff]
        %s455 = scalar_lea.vmem [#allocation3], 512
        %v456 = vld [vmem:[%s455] sm:$0xff]
        %v457 = vld [vmem:[%s455 + $0x8] sm:$0xff]
        %v458 = vld [vmem:[%s455 + $0x10] sm:$0xff]
        %v459 = vld [vmem:[%s455 + $0x18] sm:$0xff]
        %v460 = vld [vmem:[%s455 + $0x20] sm:$0xff]
        %v461 = vld [vmem:[%s455 + $0x28] sm:$0xff]
        %v462 = vld [vmem:[%s455 + $0x30] sm:$0xff]
        %v463 = vld [vmem:[%s455 + $0x38] sm:$0xff]
        %v464 = vld [vmem:[%s455 + $0x40] sm:$0xff]
        %v465 = vld [vmem:[%s455 + $0x48] sm:$0xff]
        %v466 = vld [vmem:[%s455 + $0x50] sm:$0xff]
        %v467 = vld [vmem:[%s455 + $0x58] sm:$0xff]
        %v468 = vld [vmem:[%s455 + $0x60] sm:$0xff]
        %v469 = vld [vmem:[%s455 + $0x68] sm:$0xff]
        %v470 = vld [vmem:[%s455 + $0x70] sm:$0xff]
        %v471 = vld [vmem:[%s455 + $0x78] sm:$0xff]
        %v472 = vld [vmem:[%s455 + $0x80] sm:$0xff]
        %v473 = vld [vmem:[%s455 + $0x88] sm:$0xff]
        %v474 = vld [vmem:[%s455 + $0x90] sm:$0xff]
        %v475 = vld [vmem:[%s455 + $0x98] sm:$0xff]
        %v476 = vld [vmem:[%s455 + $0xa0] sm:$0xff]
        %v477 = vld [vmem:[%s455 + $0xa8] sm:$0xff]
        %v478 = vld [vmem:[%s455 + $0xb0] sm:$0xff]
        %v479 = vld [vmem:[%s455 + $0xb8] sm:$0xff]
        %v480 = vld [vmem:[%s455 + $0xc0] sm:$0xff]
        %v481 = vld [vmem:[%s455 + $0xc8] sm:$0xff]
        %v482 = vld [vmem:[%s455 + $0xd0] sm:$0xff]
        %v483 = vld [vmem:[%s455 + $0xd8] sm:$0xff]
        %v484 = vld [vmem:[%s455 + $0xe0] sm:$0xff]
        %v485 = vld [vmem:[%s455 + $0xe8] sm:$0xff]
        %v486 = vld [vmem:[%s455 + $0xf0] sm:$0xff]
        %v487 = vld [vmem:[%s455 + $0xf8] sm:$0xff]
        %v488 = vld [vmem:[%s455 + $0x100] sm:$0xff]
        %v489 = vld [vmem:[%s455 + $0x108] sm:$0xff]
        %v490 = vld [vmem:[%s455 + $0x110] sm:$0xff]
        %v491 = vld [vmem:[%s455 + $0x118] sm:$0xff]
        %v492 = vld [vmem:[%s455 + $0x120] sm:$0xff]
        %v493 = vld [vmem:[%s455 + $0x128] sm:$0xff]
        %v494 = vld [vmem:[%s455 + $0x130] sm:$0xff]
        %v495 = vld [vmem:[%s455 + $0x138] sm:$0xff]
        %v496 = vld [vmem:[%s455 + $0x140] sm:$0xff]
        %v497 = vld [vmem:[%s455 + $0x148] sm:$0xff]
        %v498 = vld [vmem:[%s455 + $0x150] sm:$0xff]
        %v499 = vld [vmem:[%s455 + $0x158] sm:$0xff]
        %v500 = vld [vmem:[%s455 + $0x160] sm:$0xff]
        %v501 = vld [vmem:[%s455 + $0x168] sm:$0xff]
        %v502 = vld [vmem:[%s455 + $0x170] sm:$0xff]
        %v503 = vld [vmem:[%s455 + $0x178] sm:$0xff]
        %v504 = vld [vmem:[%s455 + $0x180] sm:$0xff]
        %v505 = vld [vmem:[%s455 + $0x188] sm:$0xff]
        %v506 = vld [vmem:[%s455 + $0x190] sm:$0xff]
        %v507 = vld [vmem:[%s455 + $0x198] sm:$0xff]
        %v508 = vld [vmem:[%s455 + $0x1a0] sm:$0xff]
        %v509 = vld [vmem:[%s455 + $0x1a8] sm:$0xff]
        %v510 = vld [vmem:[%s455 + $0x1b0] sm:$0xff]
        %v511 = vld [vmem:[%s455 + $0x1b8] sm:$0xff]
        %v512 = vld [vmem:[%s455 + $0x1c0] sm:$0xff]
        %v513 = vld [vmem:[%s455 + $0x1c8] sm:$0xff]
        %v514 = vld [vmem:[%s455 + $0x1d0] sm:$0xff]
        %v515 = vld [vmem:[%s455 + $0x1d8] sm:$0xff]
        %v516 = vld [vmem:[%s455 + $0x1e0] sm:$0xff]
        %v517 = vld [vmem:[%s455 + $0x1e8] sm:$0xff]
        %v518 = vld [vmem:[%s455 + $0x1f0] sm:$0xff]
        %v519 = vld [vmem:[%s455 + $0x1f8] sm:$0xff]
        %520 = vmatprep.subr.mxu0 %v457
        %521 = vmatpush1.msra.mxu0 %v456
        %522 = vmatprep.subr.mxu0 %v459
        %523 = vmatpush1.msra.mxu0 %v458
        %524 = vmatprep.subr.mxu0 %v461
        %525 = vmatpush1.msra.mxu0 %v460
        %526 = vmatprep.subr.mxu0 %v463
        %527 = vmatpush1.msra.mxu0 %v462
        %528 = vmatprep.subr.mxu0 %v465
        %529 = vmatpush1.msra.mxu0 %v464
        %530 = vmatprep.subr.mxu0 %v467
        %531 = vmatpush1.msra.mxu0 %v466
        %532 = vmatprep.subr.mxu0 %v469
        %533 = vmatpush1.msra.mxu0 %v468
        %534 = vmatprep.subr.mxu0 %v471
        %535 = vmatpush1.msra.mxu0 %v470
        %536 = vmatprep.subr.mxu0 %v473
        %537 = vmatpush1.msra.mxu0 %v472
        %538 = vmatprep.subr.mxu0 %v475
        %539 = vmatpush1.msra.mxu0 %v474
        %540 = vmatprep.subr.mxu0 %v477
        %541 = vmatpush1.msra.mxu0 %v476
        %542 = vmatprep.subr.mxu0 %v479
        %543 = vmatpush1.msra.mxu0 %v478
        %544 = vmatprep.subr.mxu0 %v481
        %545 = vmatpush1.msra.mxu0 %v480
        %546 = vmatprep.subr.mxu0 %v483
        %547 = vmatpush1.msra.mxu0 %v482
        %548 = vmatprep.subr.mxu0 %v485
        %549 = vmatpush1.msra.mxu0 %v484
        %550 = vmatprep.subr.mxu0 %v487
        %551 = vmatpush1.msra.mxu0 %v486
        %552 = vmatprep.subr.mxu0 %v489
        %553 = vmatpush1.msra.mxu0 %v488
        %554 = vmatprep.subr.mxu0 %v491
        %555 = vmatpush1.msra.mxu0 %v490
        %556 = vmatprep.subr.mxu0 %v493
        %557 = vmatpush1.msra.mxu0 %v492
        %558 = vmatprep.subr.mxu0 %v495
        %559 = vmatpush1.msra.mxu0 %v494
        %560 = vmatprep.subr.mxu0 %v497
        %561 = vmatpush1.msra.mxu0 %v496
        %562 = vmatprep.subr.mxu0 %v499
        %563 = vmatpush1.msra.mxu0 %v498
        %564 = vmatprep.subr.mxu0 %v501
        %565 = vmatpush1.msra.mxu0 %v500
        %566 = vmatprep.subr.mxu0 %v503
        %567 = vmatpush1.msra.mxu0 %v502
        %568 = vmatprep.subr.mxu0 %v505
        %569 = vmatpush1.msra.mxu0 %v504
        %570 = vmatprep.subr.mxu0 %v507
        %571 = vmatpush1.msra.mxu0 %v506
        %572 = vmatprep.subr.mxu0 %v509
        %573 = vmatpush1.msra.mxu0 %v508
        %574 = vmatprep.subr.mxu0 %v511
        %575 = vmatpush1.msra.mxu0 %v510
        %576 = vmatprep.subr.mxu0 %v513
        %577 = vmatpush1.msra.mxu0 %v512
        %578 = vmatprep.subr.mxu0 %v515
        %579 = vmatpush1.msra.mxu0 %v514
        %580 = vmatprep.subr.mxu0 %v517
        %581 = vmatpush1.msra.mxu0 %v516
        %582 = vmatprep.subr.mxu0 %v519
        %583 = vmatpush1.msra.mxu0 %v518
        %584 = vmatprep.mubr.f32.mxu0 %v386
        %585 = vmatmul.mubr.f32.gmra.mrb[0].mxu0 %v385
        %v586 = vpop.f32.mrb[0].mxu0
        %v587 = vadd.f32 0.0, %v586
        %v588 = vpop.f32.mrb[0].mxu0
        %v589 = vadd.f32 0.0, %v588
        %590 = vmatprep.mubr.f32.mxu0 %v454
        %591 = vmatmul.mubr.f32.gmra.mrb[0].mxu0 %v453
        %v592 = vpop.f32.mrb[0].mxu0
        %v593 = vadd.f32 0.0, %v592
        %v594 = vpop.f32.mrb[0].mxu0
        %v595 = vadd.f32 0.0, %v594
        %596 = vdwg.mxu0
        %vm603 = vcmask 1040384
        %v604 = vrot.slane %v383, 7
        %v605 = vrot.slane %v385, 7
        %v606 = vsel %vm603, %v604, %v605
        %v607 = vrot.slane %v384, 7
        %v608 = vrot.slane %v386, 7
        %v609 = vsel %vm603, %v607, %v608
        %v610 = vrot.slane %v387, 7
        %v611 = vsel %vm603, %v605, %v610
        %v612 = vrot.slane %v388, 7
        %v613 = vsel %vm603, %v608, %v612
        %618 = vmatprep.subr.mxu0 %v390
        %619 = vmatpush1.msra.mxu0 %v389
        %620 = vmatprep.subr.mxu0 %v392
        %621 = vmatpush1.msra.mxu0 %v391
        %622 = vmatprep.subr.mxu0 %v394
        %623 = vmatpush1.msra.mxu0 %v393
        %624 = vmatprep.subr.mxu0 %v396
        %625 = vmatpush1.msra.mxu0 %v395
        %626 = vmatprep.subr.mxu0 %v398
        %627 = vmatpush1.msra.mxu0 %v397
        %628 = vmatprep.subr.mxu0 %v400
        %629 = vmatpush1.msra.mxu0 %v399
        %630 = vmatprep.subr.mxu0 %v402
        %631 = vmatpush1.msra.mxu0 %v401
        %632 = vmatprep.subr.mxu0 %v404
        %633 = vmatpush1.msra.mxu0 %v403
        %634 = vmatprep.subr.mxu0 %v406
        %635 = vmatpush1.msra.mxu0 %v405
        %636 = vmatprep.subr.mxu0 %v408
        %637 = vmatpush1.msra.mxu0 %v407
        %638 = vmatprep.subr.mxu0 %v410
        %639 = vmatpush1.msra.mxu0 %v409
        %640 = vmatprep.subr.mxu0 %v412
        %641 = vmatpush1.msra.mxu0 %v411
        %642 = vmatprep.subr.mxu0 %v414
        %643 = vmatpush1.msra.mxu0 %v413
        %644 = vmatprep.subr.mxu0 %v416
        %645 = vmatpush1.msra.mxu0 %v415
        %646 = vmatprep.subr.mxu0 %v418
        %647 = vmatpush1.msra.mxu0 %v417
        %648 = vmatprep.subr.mxu0 %v420
        %649 = vmatpush1.msra.mxu0 %v419
        %650 = vmatprep.subr.mxu0 %v422
        %651 = vmatpush1.msra.mxu0 %v421
        %652 = vmatprep.subr.mxu0 %v424
        %653 = vmatpush1.msra.mxu0 %v423
        %654 = vmatprep.subr.mxu0 %v426
        %655 = vmatpush1.msra.mxu0 %v425
        %656 = vmatprep.subr.mxu0 %v428
        %657 = vmatpush1.msra.mxu0 %v427
        %658 = vmatprep.subr.mxu0 %v430
        %659 = vmatpush1.msra.mxu0 %v429
        %660 = vmatprep.subr.mxu0 %v432
        %661 = vmatpush1.msra.mxu0 %v431
        %662 = vmatprep.subr.mxu0 %v434
        %663 = vmatpush1.msra.mxu0 %v433
        %664 = vmatprep.subr.mxu0 %v436
        %665 = vmatpush1.msra.mxu0 %v435
        %666 = vmatprep.subr.mxu0 %v438
        %667 = vmatpush1.msra.mxu0 %v437
        %668 = vmatprep.subr.mxu0 %v440
        %669 = vmatpush1.msra.mxu0 %v439
        %670 = vmatprep.subr.mxu0 %v442
        %671 = vmatpush1.msra.mxu0 %v441
        %672 = vmatprep.subr.mxu0 %v444
        %673 = vmatpush1.msra.mxu0 %v443
        %674 = vmatprep.subr.mxu0 %v446
        %675 = vmatpush1.msra.mxu0 %v445
        %676 = vmatprep.subr.mxu0 %v448
        %677 = vmatpush1.msra.mxu0 %v447
        %678 = vmatprep.subr.mxu0 %v450
        %679 = vmatpush1.msra.mxu0 %v449
        %680 = vmatprep.subr.mxu0 %v452
        %681 = vmatpush1.msra.mxu0 %v451
        %682 = vmatprep.mubr.f32.mxu0 %v609
        %683 = vmatmul.mubr.f32.gmra.mrb[0].mxu0 %v606
        %v684 = vpop.f32.mrb[0].mxu0
        %v685 = vadd.f32 %v587, %v684
        %v686 = vpop.f32.mrb[0].mxu0
        %v687 = vadd.f32 %v589, %v686
        %688 = vmatprep.mubr.f32.mxu0 %v613
        %689 = vmatmul.mubr.f32.gmra.mrb[0].mxu0 %v611
        %v690 = vpop.f32.mrb[0].mxu0
        %v691 = vadd.f32 %v593, %v690
        %v692 = vpop.f32.mrb[0].mxu0
        %v693 = vadd.f32 %v595, %v692
        %694 = vdwg.mxu0
        %v695 = vld [vmem:[#allocation2 + $0x10] sm:$0xfe]
        %v696 = vld [vmem:[#allocation2 + $0x18] sm:$0xfe]
        %v697 = vld [vmem:[#allocation2 + $0x20] sm:$0xff]
        %v698 = vld [vmem:[#allocation2 + $0x28] sm:$0xff]
        %v699 = vld [vmem:[#allocation2 + $0x30] sm:$0x1]
        %v700 = vld [vmem:[#allocation2 + $0x38] sm:$0x1]
        %s701 = scalar_lea.vmem [#allocation3], 1024
        %v702 = vld [vmem:[%s701] sm:$0xff]
        %v703 = vld [vmem:[%s701 + $0x8] sm:$0xff]
        %v704 = vld [vmem:[%s701 + $0x10] sm:$0xff]
        %v705 = vld [vmem:[%s701 + $0x18] sm:$0xff]
        %v706 = vld [vmem:[%s701 + $0x20] sm:$0xff]
        %v707 = vld [vmem:[%s701 + $0x28] sm:$0xff]
        %v708 = vld [vmem:[%s701 + $0x30] sm:$0xff]
        %v709 = vld [vmem:[%s701 + $0x38] sm:$0xff]
        %v710 = vld [vmem:[%s701 + $0x40] sm:$0xff]
        %v711 = vld [vmem:[%s701 + $0x48] sm:$0xff]
        %v712 = vld [vmem:[%s701 + $0x50] sm:$0xff]
        %v713 = vld [vmem:[%s701 + $0x58] sm:$0xff]
        %v714 = vld [vmem:[%s701 + $0x60] sm:$0xff]
        %v715 = vld [vmem:[%s701 + $0x68] sm:$0xff]
        %v716 = vld [vmem:[%s701 + $0x70] sm:$0xff]
        %v717 = vld [vmem:[%s701 + $0x78] sm:$0xff]
        %v718 = vld [vmem:[%s701 + $0x80] sm:$0xff]
        %v719 = vld [vmem:[%s701 + $0x88] sm:$0xff]
        %v720 = vld [vmem:[%s701 + $0x90] sm:$0xff]
        %v721 = vld [vmem:[%s701 + $0x98] sm:$0xff]
        %v722 = vld [vmem:[%s701 + $0xa0] sm:$0xff]
        %v723 = vld [vmem:[%s701 + $0xa8] sm:$0xff]
        %v724 = vld [vmem:[%s701 + $0xb0] sm:$0xff]
        %v725 = vld [vmem:[%s701 + $0xb8] sm:$0xff]
        %v726 = vld [vmem:[%s701 + $0xc0] sm:$0xff]
        %v727 = vld [vmem:[%s701 + $0xc8] sm:$0xff]
        %v728 = vld [vmem:[%s701 + $0xd0] sm:$0xff]
        %v729 = vld [vmem:[%s701 + $0xd8] sm:$0xff]
        %v730 = vld [vmem:[%s701 + $0xe0] sm:$0xff]
        %v731 = vld [vmem:[%s701 + $0xe8] sm:$0xff]
        %v732 = vld [vmem:[%s701 + $0xf0] sm:$0xff]
        %v733 = vld [vmem:[%s701 + $0xf8] sm:$0xff]
        %v734 = vld [vmem:[%s701 + $0x100] sm:$0xff]
        %v735 = vld [vmem:[%s701 + $0x108] sm:$0xff]
        %v736 = vld [vmem:[%s701 + $0x110] sm:$0xff]
        %v737 = vld [vmem:[%s701 + $0x118] sm:$0xff]
        %v738 = vld [vmem:[%s701 + $0x120] sm:$0xff]
        %v739 = vld [vmem:[%s701 + $0x128] sm:$0xff]
        %v740 = vld [vmem:[%s701 + $0x130] sm:$0xff]
        %v741 = vld [vmem:[%s701 + $0x138] sm:$0xff]
        %v742 = vld [vmem:[%s701 + $0x140] sm:$0xff]
        %v743 = vld [vmem:[%s701 + $0x148] sm:$0xff]
        %v744 = vld [vmem:[%s701 + $0x150] sm:$0xff]
        %v745 = vld [vmem:[%s701 + $0x158] sm:$0xff]
        %v746 = vld [vmem:[%s701 + $0x160] sm:$0xff]
        %v747 = vld [vmem:[%s701 + $0x168] sm:$0xff]
        %v748 = vld [vmem:[%s701 + $0x170] sm:$0xff]
        %v749 = vld [vmem:[%s701 + $0x178] sm:$0xff]
        %v750 = vld [vmem:[%s701 + $0x180] sm:$0xff]
        %v751 = vld [vmem:[%s701 + $0x188] sm:$0xff]
        %v752 = vld [vmem:[%s701 + $0x190] sm:$0xff]
        %v753 = vld [vmem:[%s701 + $0x198] sm:$0xff]
        %v754 = vld [vmem:[%s701 + $0x1a0] sm:$0xff]
        %v755 = vld [vmem:[%s701 + $0x1a8] sm:$0xff]
        %v756 = vld [vmem:[%s701 + $0x1b0] sm:$0xff]
        %v757 = vld [vmem:[%s701 + $0x1b8] sm:$0xff]
        %v758 = vld [vmem:[%s701 + $0x1c0] sm:$0xff]
        %v759 = vld [vmem:[%s701 + $0x1c8] sm:$0xff]
        %v760 = vld [vmem:[%s701 + $0x1d0] sm:$0xff]
        %v761 = vld [vmem:[%s701 + $0x1d8] sm:$0xff]
        %v762 = vld [vmem:[%s701 + $0x1e0] sm:$0xff]
        %v763 = vld [vmem:[%s701 + $0x1e8] sm:$0xff]
        %v764 = vld [vmem:[%s701 + $0x1f0] sm:$0xff]
        %v765 = vld [vmem:[%s701 + $0x1f8] sm:$0xff]
        %vm772 = vcmask 1046528
        %v773 = vrot.slane %v695, 1
        %v774 = vrot.slane %v697, 1
        %v775 = vsel %vm772, %v773, %v774
        %v776 = vrot.slane %v696, 1
        %v777 = vrot.slane %v698, 1
        %v778 = vsel %vm772, %v776, %v777
        %v779 = vrot.slane %v699, 1
        %v780 = vsel %vm772, %v774, %v779
        %v781 = vrot.slane %v700, 1
        %v782 = vsel %vm772, %v777, %v781
        %787 = vmatprep.subr.mxu0 %v703
        %788 = vmatpush1.msra.mxu0 %v702
        %789 = vmatprep.subr.mxu0 %v705
        %790 = vmatpush1.msra.mxu0 %v704
        %791 = vmatprep.subr.mxu0 %v707
        %792 = vmatpush1.msra.mxu0 %v706
        %793 = vmatprep.subr.mxu0 %v709
        %794 = vmatpush1.msra.mxu0 %v708
        %795 = vmatprep.subr.mxu0 %v711
        %796 = vmatpush1.msra.mxu0 %v710
        %797 = vmatprep.subr.mxu0 %v713
        %798 = vmatpush1.msra.mxu0 %v712
        %799 = vmatprep.subr.mxu0 %v715
        %800 = vmatpush1.msra.mxu0 %v714
        %801 = vmatprep.subr.mxu0 %v717
        %802 = vmatpush1.msra.mxu0 %v716
        %803 = vmatprep.subr.mxu0 %v719
        %804 = vmatpush1.msra.mxu0 %v718
        %805 = vmatprep.subr.mxu0 %v721
        %806 = vmatpush1.msra.mxu0 %v720
        %807 = vmatprep.subr.mxu0 %v723
        %808 = vmatpush1.msra.mxu0 %v722
        %809 = vmatprep.subr.mxu0 %v725
        %810 = vmatpush1.msra.mxu0 %v724
        %811 = vmatprep.subr.mxu0 %v727
        %812 = vmatpush1.msra.mxu0 %v726
        %813 = vmatprep.subr.mxu0 %v729
        %814 = vmatpush1.msra.mxu0 %v728
        %815 = vmatprep.subr.mxu0 %v731
        %816 = vmatpush1.msra.mxu0 %v730
        %817 = vmatprep.subr.mxu0 %v733
        %818 = vmatpush1.msra.mxu0 %v732
        %819 = vmatprep.subr.mxu0 %v735
        %820 = vmatpush1.msra.mxu0 %v734
        %821 = vmatprep.subr.mxu0 %v737
        %822 = vmatpush1.msra.mxu0 %v736
        %823 = vmatprep.subr.mxu0 %v739
        %824 = vmatpush1.msra.mxu0 %v738
        %825 = vmatprep.subr.mxu0 %v741
        %826 = vmatpush1.msra.mxu0 %v740
        %827 = vmatprep.subr.mxu0 %v743
        %828 = vmatpush1.msra.mxu0 %v742
        %829 = vmatprep.subr.mxu0 %v745
        %830 = vmatpush1.msra.mxu0 %v744
        %831 = vmatprep.subr.mxu0 %v747
        %832 = vmatpush1.msra.mxu0 %v746
        %833 = vmatprep.subr.mxu0 %v749
        %834 = vmatpush1.msra.mxu0 %v748
        %835 = vmatprep.subr.mxu0 %v751
        %836 = vmatpush1.msra.mxu0 %v750
        %837 = vmatprep.subr.mxu0 %v753
        %838 = vmatpush1.msra.mxu0 %v752
        %839 = vmatprep.subr.mxu0 %v755
        %840 = vmatpush1.msra.mxu0 %v754
        %841 = vmatprep.subr.mxu0 %v757
        %842 = vmatpush1.msra.mxu0 %v756
        %843 = vmatprep.subr.mxu0 %v759
        %844 = vmatpush1.msra.mxu0 %v758
        %845 = vmatprep.subr.mxu0 %v761
        %846 = vmatpush1.msra.mxu0 %v760
        %847 = vmatprep.subr.mxu0 %v763
        %848 = vmatpush1.msra.mxu0 %v762
        %849 = vmatprep.subr.mxu0 %v765
        %850 = vmatpush1.msra.mxu0 %v764
        %851 = vmatprep.mubr.f32.mxu0 %v778
        %852 = vmatmul.mubr.f32.gmra.mrb[0].mxu0 %v775
        %v853 = vpop.f32.mrb[0].mxu0
        %v854 = vadd.f32 0.0, %v853
        %v855 = vpop.f32.mrb[0].mxu0
        %v856 = vadd.f32 0.0, %v855
        %857 = vmatprep.mubr.f32.mxu0 %v782
        %858 = vmatmul.mubr.f32.gmra.mrb[0].mxu0 %v780
        %v859 = vpop.f32.mrb[0].mxu0
        %v860 = vadd.f32 0.0, %v859
        %v861 = vpop.f32.mrb[0].mxu0
        %v862 = vadd.f32 0.0, %v861
        %863 = vdwg.mxu0
        %v864 = vadd.f32 %v685, %v854
        %v865 = vadd.f32 %v687, %v856
        %v866 = vadd.f32 %v691, %v860
        %v867 = vadd.f32 %v693, %v862
        %v868 = vld [vmem:[%s2] sm:$0x3]
        %v870 = vlaneseq
        %v871 = vshrl.u32 %v870, 7
        %v872 = vsub.s32 0, %v871
        %v873 = vrot.slane %v868, %v872
        %v874 = vlaneseq
        %v875 = vshrl.u32 %v874, 7
        %v876 = vsub.s32 1, %v875
        %v877 = vrot.slane %v868, %v876
        %v880 = vadd.f32 %v864, %v873
        %v881 = vadd.f32 %v865, %v877
        %v882 = vadd.f32 %v866, %v873
        %v883 = vadd.f32 %v867, %v877
        %v884 = vmax.f32 %v880, 0.0
        %v885 = vmax.f32 %v881, 0.0
        %v886 = vmax.f32 %v882, 0.0
        %v887 = vmax.f32 %v883, 0.0
        %888 = vst [vmem:[#allocation2 + $0x10] sm:$0xff] %v884
        %889 = vst [vmem:[#allocation2 + $0x18] sm:$0xff] %v885
        %890 = vst [vmem:[#allocation2 + $0x20] sm:$0xff] %v886
        %891 = vst [vmem:[#allocation2 + $0x28] sm:$0xff] %v887
        %v892 = vld [vmem:[#allocation2] sm:$0x80]
        %v893 = vld [vmem:[#allocation2 + $0x8] sm:$0x80]
        %v894 = vld [vmem:[#allocation2 + $0x10] sm:$0xff]
        %v895 = vld [vmem:[#allocation2 + $0x18] sm:$0xff]
        %v896 = vld [vmem:[#allocation2 + $0x20] sm:$0x7f]
        %v897 = vld [vmem:[#allocation2 + $0x28] sm:$0x7f]
        %v898 = vld [vmem:[#allocation5] sm:$0xff]
        %v899 = vld [vmem:[#allocation5 + $0x8] sm:$0xff]
        %v900 = vld [vmem:[#allocation5 + $0x10] sm:$0xff]
        %v901 = vld [vmem:[#allocation5 + $0x18] sm:$0xff]
        %v902 = vld [vmem:[#allocation5 + $0x20] sm:$0xff]
        %v903 = vld [vmem:[#allocation5 + $0x28] sm:$0xff]
        %v904 = vld [vmem:[#allocation5 + $0x30] sm:$0xff]
        %v905 = vld [vmem:[#allocation5 + $0x38] sm:$0xff]
        %v906 = vld [vmem:[#allocation5 + $0x40] sm:$0xff]
        %v907 = vld [vmem:[#allocation5 + $0x48] sm:$0xff]
        %v908 = vld [vmem:[#allocation5 + $0x50] sm:$0xff]
        %v909 = vld [vmem:[#allocation5 + $0x58] sm:$0xff]
        %v910 = vld [vmem:[#allocation5 + $0x60] sm:$0xff]
        %v911 = vld [vmem:[#allocation5 + $0x68] sm:$0xff]
        %v912 = vld [vmem:[#allocation5 + $0x70] sm:$0xff]
        %v913 = vld [vmem:[#allocation5 + $0x78] sm:$0xff]
        %v914 = vld [vmem:[#allocation5 + $0x80] sm:$0xff]
        %v915 = vld [vmem:[#allocation5 + $0x88] sm:$0xff]
        %v916 = vld [vmem:[#allocation5 + $0x90] sm:$0xff]
        %v917 = vld [vmem:[#allocation5 + $0x98] sm:$0xff]
        %v918 = vld [vmem:[#allocation5 + $0xa0] sm:$0xff]
        %v919 = vld [vmem:[#allocation5 + $0xa8] sm:$0xff]
        %v920 = vld [vmem:[#allocation5 + $0xb0] sm:$0xff]
        %v921 = vld [vmem:[#allocation5 + $0xb8] sm:$0xff]
        %v922 = vld [vmem:[#allocation5 + $0xc0] sm:$0xff]
        %v923 = vld [vmem:[#allocation5 + $0xc8] sm:$0xff]
        %v924 = vld [vmem:[#allocation5 + $0xd0] sm:$0xff]
        %v925 = vld [vmem:[#allocation5 + $0xd8] sm:$0xff]
        %v926 = vld [vmem:[#allocation5 + $0xe0] sm:$0xff]
        %v927 = vld [vmem:[#allocation5 + $0xe8] sm:$0xff]
        %v928 = vld [vmem:[#allocation5 + $0xf0] sm:$0xff]
        %v929 = vld [vmem:[#allocation5 + $0xf8] sm:$0xff]
        %v930 = vld [vmem:[#allocation5 + $0x100] sm:$0xff]
        %v931 = vld [vmem:[#allocation5 + $0x108] sm:$0xff]
        %v932 = vld [vmem:[#allocation5 + $0x110] sm:$0xff]
        %v933 = vld [vmem:[#allocation5 + $0x118] sm:$0xff]
        %v934 = vld [vmem:[#allocation5 + $0x120] sm:$0xff]
        %v935 = vld [vmem:[#allocation5 + $0x128] sm:$0xff]
        %v936 = vld [vmem:[#allocation5 + $0x130] sm:$0xff]
        %v937 = vld [vmem:[#allocation5 + $0x138] sm:$0xff]
        %v938 = vld [vmem:[#allocation5 + $0x140] sm:$0xff]
        %v939 = vld [vmem:[#allocation5 + $0x148] sm:$0xff]
        %v940 = vld [vmem:[#allocation5 + $0x150] sm:$0xff]
        %v941 = vld [vmem:[#allocation5 + $0x158] sm:$0xff]
        %v942 = vld [vmem:[#allocation5 + $0x160] sm:$0xff]
        %v943 = vld [vmem:[#allocation5 + $0x168] sm:$0xff]
        %v944 = vld [vmem:[#allocation5 + $0x170] sm:$0xff]
        %v945 = vld [vmem:[#allocation5 + $0x178] sm:$0xff]
        %v946 = vld [vmem:[#allocation5 + $0x180] sm:$0xff]
        %v947 = vld [vmem:[#allocation5 + $0x188] sm:$0xff]
        %v948 = vld [vmem:[#allocation5 + $0x190] sm:$0xff]
        %v949 = vld [vmem:[#allocation5 + $0x198] sm:$0xff]
        %v950 = vld [vmem:[#allocation5 + $0x1a0] sm:$0xff]
        %v951 = vld [vmem:[#allocation5 + $0x1a8] sm:$0xff]
        %v952 = vld [vmem:[#allocation5 + $0x1b0] sm:$0xff]
        %v953 = vld [vmem:[#allocation5 + $0x1b8] sm:$0xff]
        %v954 = vld [vmem:[#allocation5 + $0x1c0] sm:$0xff]
        %v955 = vld [vmem:[#allocation5 + $0x1c8] sm:$0xff]
        %v956 = vld [vmem:[#allocation5 + $0x1d0] sm:$0xff]
        %v957 = vld [vmem:[#allocation5 + $0x1d8] sm:$0xff]
        %v958 = vld [vmem:[#allocation5 + $0x1e0] sm:$0xff]
        %v959 = vld [vmem:[#allocation5 + $0x1e8] sm:$0xff]
        %v960 = vld [vmem:[#allocation5 + $0x1f0] sm:$0xff]
        %v961 = vld [vmem:[#allocation5 + $0x1f8] sm:$0xff]
        %v962 = vld [vmem:[#allocation2 + $0x20] sm:$0xff]
        %v963 = vld [vmem:[#allocation2 + $0x28] sm:$0xff]
        %s964 = scalar_lea.vmem [#allocation5], 512
        %v965 = vld [vmem:[%s964] sm:$0xff]
        %v966 = vld [vmem:[%s964 + $0x8] sm:$0xff]
        %v967 = vld [vmem:[%s964 + $0x10] sm:$0xff]
        %v968 = vld [vmem:[%s964 + $0x18] sm:$0xff]
        %v969 = vld [vmem:[%s964 + $0x20] sm:$0xff]
        %v970 = vld [vmem:[%s964 + $0x28] sm:$0xff]
        %v971 = vld [vmem:[%s964 + $0x30] sm:$0xff]
        %v972 = vld [vmem:[%s964 + $0x38] sm:$0xff]
        %v973 = vld [vmem:[%s964 + $0x40] sm:$0xff]
        %v974 = vld [vmem:[%s964 + $0x48] sm:$0xff]
        %v975 = vld [vmem:[%s964 + $0x50] sm:$0xff]
        %v976 = vld [vmem:[%s964 + $0x58] sm:$0xff]
        %v977 = vld [vmem:[%s964 + $0x60] sm:$0xff]
        %v978 = vld [vmem:[%s964 + $0x68] sm:$0xff]
        %v979 = vld [vmem:[%s964 + $0x70] sm:$0xff]
        %v980 = vld [vmem:[%s964 + $0x78] sm:$0xff]
        %v981 = vld [vmem:[%s964 + $0x80] sm:$0xff]
        %v982 = vld [vmem:[%s964 + $0x88] sm:$0xff]
        %v983 = vld [vmem:[%s964 + $0x90] sm:$0xff]
        %v984 = vld [vmem:[%s964 + $0x98] sm:$0xff]
        %v985 = vld [vmem:[%s964 + $0xa0] sm:$0xff]
        %v986 = vld [vmem:[%s964 + $0xa8] sm:$0xff]
        %v987 = vld [vmem:[%s964 + $0xb0] sm:$0xff]
        %v988 = vld [vmem:[%s964 + $0xb8] sm:$0xff]
        %v989 = vld [vmem:[%s964 + $0xc0] sm:$0xff]
        %v990 = vld [vmem:[%s964 + $0xc8] sm:$0xff]
        %v991 = vld [vmem:[%s964 + $0xd0] sm:$0xff]
        %v992 = vld [vmem:[%s964 + $0xd8] sm:$0xff]
        %v993 = vld [vmem:[%s964 + $0xe0] sm:$0xff]
        %v994 = vld [vmem:[%s964 + $0xe8] sm:$0xff]
        %v995 = vld [vmem:[%s964 + $0xf0] sm:$0xff]
        %v996 = vld [vmem:[%s964 + $0xf8] sm:$0xff]
        %v997 = vld [vmem:[%s964 + $0x100] sm:$0xff]
        %v998 = vld [vmem:[%s964 + $0x108] sm:$0xff]
        %v999 = vld [vmem:[%s964 + $0x110] sm:$0xff]
        %v1000 = vld [vmem:[%s964 + $0x118] sm:$0xff]
        %v1001 = vld [vmem:[%s964 + $0x120] sm:$0xff]
        %v1002 = vld [vmem:[%s964 + $0x128] sm:$0xff]
        %v1003 = vld [vmem:[%s964 + $0x130] sm:$0xff]
        %v1004 = vld [vmem:[%s964 + $0x138] sm:$0xff]
        %v1005 = vld [vmem:[%s964 + $0x140] sm:$0xff]
        %v1006 = vld [vmem:[%s964 + $0x148] sm:$0xff]
        %v1007 = vld [vmem:[%s964 + $0x150] sm:$0xff]
        %v1008 = vld [vmem:[%s964 + $0x158] sm:$0xff]
        %v1009 = vld [vmem:[%s964 + $0x160] sm:$0xff]
        %v1010 = vld [vmem:[%s964 + $0x168] sm:$0xff]
        %v1011 = vld [vmem:[%s964 + $0x170] sm:$0xff]
        %v1012 = vld [vmem:[%s964 + $0x178] sm:$0xff]
        %v1013 = vld [vmem:[%s964 + $0x180] sm:$0xff]
        %v1014 = vld [vmem:[%s964 + $0x188] sm:$0xff]
        %v1015 = vld [vmem:[%s964 + $0x190] sm:$0xff]
        %v1016 = vld [vmem:[%s964 + $0x198] sm:$0xff]
        %v1017 = vld [vmem:[%s964 + $0x1a0] sm:$0xff]
        %v1018 = vld [vmem:[%s964 + $0x1a8] sm:$0xff]
        %v1019 = vld [vmem:[%s964 + $0x1b0] sm:$0xff]
        %v1020 = vld [vmem:[%s964 + $0x1b8] sm:$0xff]
        %v1021 = vld [vmem:[%s964 + $0x1c0] sm:$0xff]
        %v1022 = vld [vmem:[%s964 + $0x1c8] sm:$0xff]
        %v1023 = vld [vmem:[%s964 + $0x1d0] sm:$0xff]
        %v1024 = vld [vmem:[%s964 + $0x1d8] sm:$0xff]
        %v1025 = vld [vmem:[%s964 + $0x1e0] sm:$0xff]
        %v1026 = vld [vmem:[%s964 + $0x1e8] sm:$0xff]
        %v1027 = vld [vmem:[%s964 + $0x1f0] sm:$0xff]
        %v1028 = vld [vmem:[%s964 + $0x1f8] sm:$0xff]
        %1029 = vmatprep.subr.mxu0 %v966
        %1030 = vmatpush1.msra.mxu0 %v965
        %1031 = vmatprep.subr.mxu0 %v968
        %1032 = vmatpush1.msra.mxu0 %v967
        %1033 = vmatprep.subr.mxu0 %v970
        %1034 = vmatpush1.msra.mxu0 %v969
        %1035 = vmatprep.subr.mxu0 %v972
        %1036 = vmatpush1.msra.mxu0 %v971
        %1037 = vmatprep.subr.mxu0 %v974
        %1038 = vmatpush1.msra.mxu0 %v973
        %1039 = vmatprep.subr.mxu0 %v976
        %1040 = vmatpush1.msra.mxu0 %v975
        %1041 = vmatprep.subr.mxu0 %v978
        %1042 = vmatpush1.msra.mxu0 %v977
        %1043 = vmatprep.subr.mxu0 %v980
        %1044 = vmatpush1.msra.mxu0 %v979
        %1045 = vmatprep.subr.mxu0 %v982
        %1046 = vmatpush1.msra.mxu0 %v981
        %1047 = vmatprep.subr.mxu0 %v984
        %1048 = vmatpush1.msra.mxu0 %v983
        %1049 = vmatprep.subr.mxu0 %v986
        %1050 = vmatpush1.msra.mxu0 %v985
        %1051 = vmatprep.subr.mxu0 %v988
        %1052 = vmatpush1.msra.mxu0 %v987
        %1053 = vmatprep.subr.mxu0 %v990
        %1054 = vmatpush1.msra.mxu0 %v989
        %1055 = vmatprep.subr.mxu0 %v992
        %1056 = vmatpush1.msra.mxu0 %v991
        %1057 = vmatprep.subr.mxu0 %v994
        %1058 = vmatpush1.msra.mxu0 %v993
        %1059 = vmatprep.subr.mxu0 %v996
        %1060 = vmatpush1.msra.mxu0 %v995
        %1061 = vmatprep.subr.mxu0 %v998
        %1062 = vmatpush1.msra.mxu0 %v997
        %1063 = vmatprep.subr.mxu0 %v1000
        %1064 = vmatpush1.msra.mxu0 %v999
        %1065 = vmatprep.subr.mxu0 %v1002
        %1066 = vmatpush1.msra.mxu0 %v1001
        %1067 = vmatprep.subr.mxu0 %v1004
        %1068 = vmatpush1.msra.mxu0 %v1003
        %1069 = vmatprep.subr.mxu0 %v1006
        %1070 = vmatpush1.msra.mxu0 %v1005
        %1071 = vmatprep.subr.mxu0 %v1008
        %1072 = vmatpush1.msra.mxu0 %v1007
        %1073 = vmatprep.subr.mxu0 %v1010
        %1074 = vmatpush1.msra.mxu0 %v1009
        %1075 = vmatprep.subr.mxu0 %v1012
        %1076 = vmatpush1.msra.mxu0 %v1011
        %1077 = vmatprep.subr.mxu0 %v1014
        %1078 = vmatpush1.msra.mxu0 %v1013
        %1079 = vmatprep.subr.mxu0 %v1016
        %1080 = vmatpush1.msra.mxu0 %v1015
        %1081 = vmatprep.subr.mxu0 %v1018
        %1082 = vmatpush1.msra.mxu0 %v1017
        %1083 = vmatprep.subr.mxu0 %v1020
        %1084 = vmatpush1.msra.mxu0 %v1019
        %1085 = vmatprep.subr.mxu0 %v1022
        %1086 = vmatpush1.msra.mxu0 %v1021
        %1087 = vmatprep.subr.mxu0 %v1024
        %1088 = vmatpush1.msra.mxu0 %v1023
        %1089 = vmatprep.subr.mxu0 %v1026
        %1090 = vmatpush1.msra.mxu0 %v1025
        %1091 = vmatprep.subr.mxu0 %v1028
        %1092 = vmatpush1.msra.mxu0 %v1027
        %1093 = vmatprep.mubr.f32.mxu0 %v895
        %1094 = vmatmul.mubr.f32.gmra.mrb[0].mxu0 %v894
        %v1095 = vpop.f32.mrb[0].mxu0
        %v1096 = vadd.f32 0.0, %v1095
        %v1097 = vpop.f32.mrb[0].mxu0
        %v1098 = vadd.f32 0.0, %v1097
        %1099 = vmatprep.mubr.f32.mxu0 %v963
        %1100 = vmatmul.mubr.f32.gmra.mrb[0].mxu0 %v962
        %v1101 = vpop.f32.mrb[0].mxu0
        %v1102 = vadd.f32 0.0, %v1101
        %v1103 = vpop.f32.mrb[0].mxu0
        %v1104 = vadd.f32 0.0, %v1103
        %1105 = vdwg.mxu0
        %v1112 = vrot.slane %v892, 7
        %v1113 = vrot.slane %v894, 7
        %v1114 = vsel %vm603, %v1112, %v1113
        %v1115 = vrot.slane %v893, 7
        %v1116 = vrot.slane %v895, 7
        %v1117 = vsel %vm603, %v1115, %v1116
        %v1118 = vrot.slane %v896, 7
        %v1119 = vsel %vm603, %v1113, %v1118
        %v1120 = vrot.slane %v897, 7
        %v1121 = vsel %vm603, %v1116, %v1120
        %1126 = vmatprep.subr.mxu0 %v899
        %1127 = vmatpush1.msra.mxu0 %v898
        %1128 = vmatprep.subr.mxu0 %v901
        %1129 = vmatpush1.msra.mxu0 %v900
        %1130 = vmatprep.subr.mxu0 %v903
        %1131 = vmatpush1.msra.mxu0 %v902
        %1132 = vmatprep.subr.mxu0 %v905
        %1133 = vmatpush1.msra.mxu0 %v904
        %1134 = vmatprep.subr.mxu0 %v907
        %1135 = vmatpush1.msra.mxu0 %v906
        %1136 = vmatprep.subr.mxu0 %v909
        %1137 = vmatpush1.msra.mxu0 %v908
        %1138 = vmatprep.subr.mxu0 %v911
        %1139 = vmatpush1.msra.mxu0 %v910
        %1140 = vmatprep.subr.mxu0 %v913
        %1141 = vmatpush1.msra.mxu0 %v912
        %1142 = vmatprep.subr.mxu0 %v915
        %1143 = vmatpush1.msra.mxu0 %v914
        %1144 = vmatprep.subr.mxu0 %v917
        %1145 = vmatpush1.msra.mxu0 %v916
        %1146 = vmatprep.subr.mxu0 %v919
        %1147 = vmatpush1.msra.mxu0 %v918
        %1148 = vmatprep.subr.mxu0 %v921
        %1149 = vmatpush1.msra.mxu0 %v920
        %1150 = vmatprep.subr.mxu0 %v923
        %1151 = vmatpush1.msra.mxu0 %v922
        %1152 = vmatprep.subr.mxu0 %v925
        %1153 = vmatpush1.msra.mxu0 %v924
        %1154 = vmatprep.subr.mxu0 %v927
        %1155 = vmatpush1.msra.mxu0 %v926
        %1156 = vmatprep.subr.mxu0 %v929
        %1157 = vmatpush1.msra.mxu0 %v928
        %1158 = vmatprep.subr.mxu0 %v931
        %1159 = vmatpush1.msra.mxu0 %v930
        %1160 = vmatprep.subr.mxu0 %v933
        %1161 = vmatpush1.msra.mxu0 %v932
        %1162 = vmatprep.subr.mxu0 %v935
        %1163 = vmatpush1.msra.mxu0 %v934
        %1164 = vmatprep.subr.mxu0 %v937
        %1165 = vmatpush1.msra.mxu0 %v936
        %1166 = vmatprep.subr.mxu0 %v939
        %1167 = vmatpush1.msra.mxu0 %v938
        %1168 = vmatprep.subr.mxu0 %v941
        %1169 = vmatpush1.msra.mxu0 %v940
        %1170 = vmatprep.subr.mxu0 %v943
        %1171 = vmatpush1.msra.mxu0 %v942
        %1172 = vmatprep.subr.mxu0 %v945
        %1173 = vmatpush1.msra.mxu0 %v944
        %1174 = vmatprep.subr.mxu0 %v947
        %1175 = vmatpush1.msra.mxu0 %v946
        %1176 = vmatprep.subr.mxu0 %v949
        %1177 = vmatpush1.msra.mxu0 %v948
        %1178 = vmatprep.subr.mxu0 %v951
        %1179 = vmatpush1.msra.mxu0 %v950
        %1180 = vmatprep.subr.mxu0 %v953
        %1181 = vmatpush1.msra.mxu0 %v952
        %1182 = vmatprep.subr.mxu0 %v955
        %1183 = vmatpush1.msra.mxu0 %v954
        %1184 = vmatprep.subr.mxu0 %v957
        %1185 = vmatpush1.msra.mxu0 %v956
        %1186 = vmatprep.subr.mxu0 %v959
        %1187 = vmatpush1.msra.mxu0 %v958
        %1188 = vmatprep.subr.mxu0 %v961
        %1189 = vmatpush1.msra.mxu0 %v960
        %1190 = vmatprep.mubr.f32.mxu0 %v1117
        %1191 = vmatmul.mubr.f32.gmra.mrb[0].mxu0 %v1114
        %v1192 = vpop.f32.mrb[0].mxu0
        %v1193 = vadd.f32 %v1096, %v1192
        %v1194 = vpop.f32.mrb[0].mxu0
        %v1195 = vadd.f32 %v1098, %v1194
        %1196 = vmatprep.mubr.f32.mxu0 %v1121
        %1197 = vmatmul.mubr.f32.gmra.mrb[0].mxu0 %v1119
        %v1198 = vpop.f32.mrb[0].mxu0
        %v1199 = vadd.f32 %v1102, %v1198
        %v1200 = vpop.f32.mrb[0].mxu0
        %v1201 = vadd.f32 %v1104, %v1200
        %1202 = vdwg.mxu0
        %v1203 = vld [vmem:[#allocation2 + $0x10] sm:$0xfe]
        %v1204 = vld [vmem:[#allocation2 + $0x18] sm:$0xfe]
        %v1205 = vld [vmem:[#allocation2 + $0x20] sm:$0xff]
        %v1206 = vld [vmem:[#allocation2 + $0x28] sm:$0xff]
        %v1207 = vld [vmem:[#allocation2 + $0x30] sm:$0x1]
        %v1208 = vld [vmem:[#allocation2 + $0x38] sm:$0x1]
        %s1209 = scalar_lea.vmem [#allocation5], 1024
        %v1210 = vld [vmem:[%s1209] sm:$0xff]
        %v1211 = vld [vmem:[%s1209 + $0x8] sm:$0xff]
        %v1212 = vld [vmem:[%s1209 + $0x10] sm:$0xff]
        %v1213 = vld [vmem:[%s1209 + $0x18] sm:$0xff]
        %v1214 = vld [vmem:[%s1209 + $0x20] sm:$0xff]
        %v1215 = vld [vmem:[%s1209 + $0x28] sm:$0xff]
        %v1216 = vld [vmem:[%s1209 + $0x30] sm:$0xff]
        %v1217 = vld [vmem:[%s1209 + $0x38] sm:$0xff]
        %v1218 = vld [vmem:[%s1209 + $0x40] sm:$0xff]
        %v1219 = vld [vmem:[%s1209 + $0x48] sm:$0xff]
        %v1220 = vld [vmem:[%s1209 + $0x50] sm:$0xff]
        %v1221 = vld [vmem:[%s1209 + $0x58] sm:$0xff]
        %v1222 = vld [vmem:[%s1209 + $0x60] sm:$0xff]
        %v1223 = vld [vmem:[%s1209 + $0x68] sm:$0xff]
        %v1224 = vld [vmem:[%s1209 + $0x70] sm:$0xff]
        %v1225 = vld [vmem:[%s1209 + $0x78] sm:$0xff]
        %v1226 = vld [vmem:[%s1209 + $0x80] sm:$0xff]
        %v1227 = vld [vmem:[%s1209 + $0x88] sm:$0xff]
        %v1228 = vld [vmem:[%s1209 + $0x90] sm:$0xff]
        %v1229 = vld [vmem:[%s1209 + $0x98] sm:$0xff]
        %v1230 = vld [vmem:[%s1209 + $0xa0] sm:$0xff]
        %v1231 = vld [vmem:[%s1209 + $0xa8] sm:$0xff]
        %v1232 = vld [vmem:[%s1209 + $0xb0] sm:$0xff]
        %v1233 = vld [vmem:[%s1209 + $0xb8] sm:$0xff]
        %v1234 = vld [vmem:[%s1209 + $0xc0] sm:$0xff]
        %v1235 = vld [vmem:[%s1209 + $0xc8] sm:$0xff]
        %v1236 = vld [vmem:[%s1209 + $0xd0] sm:$0xff]
        %v1237 = vld [vmem:[%s1209 + $0xd8] sm:$0xff]
        %v1238 = vld [vmem:[%s1209 + $0xe0] sm:$0xff]
        %v1239 = vld [vmem:[%s1209 + $0xe8] sm:$0xff]
        %v1240 = vld [vmem:[%s1209 + $0xf0] sm:$0xff]
        %v1241 = vld [vmem:[%s1209 + $0xf8] sm:$0xff]
        %v1242 = vld [vmem:[%s1209 + $0x100] sm:$0xff]
        %v1243 = vld [vmem:[%s1209 + $0x108] sm:$0xff]
        %v1244 = vld [vmem:[%s1209 + $0x110] sm:$0xff]
        %v1245 = vld [vmem:[%s1209 + $0x118] sm:$0xff]
        %v1246 = vld [vmem:[%s1209 + $0x120] sm:$0xff]
        %v1247 = vld [vmem:[%s1209 + $0x128] sm:$0xff]
        %v1248 = vld [vmem:[%s1209 + $0x130] sm:$0xff]
        %v1249 = vld [vmem:[%s1209 + $0x138] sm:$0xff]
        %v1250 = vld [vmem:[%s1209 + $0x140] sm:$0xff]
        %v1251 = vld [vmem:[%s1209 + $0x148] sm:$0xff]
        %v1252 = vld [vmem:[%s1209 + $0x150] sm:$0xff]
        %v1253 = vld [vmem:[%s1209 + $0x158] sm:$0xff]
        %v1254 = vld [vmem:[%s1209 + $0x160] sm:$0xff]
        %v1255 = vld [vmem:[%s1209 + $0x168] sm:$0xff]
        %v1256 = vld [vmem:[%s1209 + $0x170] sm:$0xff]
        %v1257 = vld [vmem:[%s1209 + $0x178] sm:$0xff]
        %v1258 = vld [vmem:[%s1209 + $0x180] sm:$0xff]
        %v1259 = vld [vmem:[%s1209 + $0x188] sm:$0xff]
        %v1260 = vld [vmem:[%s1209 + $0x190] sm:$0xff]
        %v1261 = vld [vmem:[%s1209 + $0x198] sm:$0xff]
        %v1262 = vld [vmem:[%s1209 + $0x1a0] sm:$0xff]
        %v1263 = vld [vmem:[%s1209 + $0x1a8] sm:$0xff]
        %v1264 = vld [vmem:[%s1209 + $0x1b0] sm:$0xff]
        %v1265 = vld [vmem:[%s1209 + $0x1b8] sm:$0xff]
        %v1266 = vld [vmem:[%s1209 + $0x1c0] sm:$0xff]
        %v1267 = vld [vmem:[%s1209 + $0x1c8] sm:$0xff]
        %v1268 = vld [vmem:[%s1209 + $0x1d0] sm:$0xff]
        %v1269 = vld [vmem:[%s1209 + $0x1d8] sm:$0xff]
        %v1270 = vld [vmem:[%s1209 + $0x1e0] sm:$0xff]
        %v1271 = vld [vmem:[%s1209 + $0x1e8] sm:$0xff]
        %v1272 = vld [vmem:[%s1209 + $0x1f0] sm:$0xff]
        %v1273 = vld [vmem:[%s1209 + $0x1f8] sm:$0xff]
        %v1280 = vrot.slane %v1203, 1
        %v1281 = vrot.slane %v1205, 1
        %v1282 = vsel %vm772, %v1280, %v1281
        %v1283 = vrot.slane %v1204, 1
        %v1284 = vrot.slane %v1206, 1
        %v1285 = vsel %vm772, %v1283, %v1284
        %v1286 = vrot.slane %v1207, 1
        %v1287 = vsel %vm772, %v1281, %v1286
        %v1288 = vrot.slane %v1208, 1
        %v1289 = vsel %vm772, %v1284, %v1288
        %1294 = vmatprep.subr.mxu0 %v1211
        %1295 = vmatpush1.msra.mxu0 %v1210
        %1296 = vmatprep.subr.mxu0 %v1213
        %1297 = vmatpush1.msra.mxu0 %v1212
        %1298 = vmatprep.subr.mxu0 %v1215
        %1299 = vmatpush1.msra.mxu0 %v1214
        %1300 = vmatprep.subr.mxu0 %v1217
        %1301 = vmatpush1.msra.mxu0 %v1216
        %1302 = vmatprep.subr.mxu0 %v1219
        %1303 = vmatpush1.msra.mxu0 %v1218
        %1304 = vmatprep.subr.mxu0 %v1221
        %1305 = vmatpush1.msra.mxu0 %v1220
        %1306 = vmatprep.subr.mxu0 %v1223
        %1307 = vmatpush1.msra.mxu0 %v1222
        %1308 = vmatprep.subr.mxu0 %v1225
        %1309 = vmatpush1.msra.mxu0 %v1224
        %1310 = vmatprep.subr.mxu0 %v1227
        %1311 = vmatpush1.msra.mxu0 %v1226
        %1312 = vmatprep.subr.mxu0 %v1229
        %1313 = vmatpush1.msra.mxu0 %v1228
        %1314 = vmatprep.subr.mxu0 %v1231
        %1315 = vmatpush1.msra.mxu0 %v1230
        %1316 = vmatprep.subr.mxu0 %v1233
        %1317 = vmatpush1.msra.mxu0 %v1232
        %1318 = vmatprep.subr.mxu0 %v1235
        %1319 = vmatpush1.msra.mxu0 %v1234
        %1320 = vmatprep.subr.mxu0 %v1237
        %1321 = vmatpush1.msra.mxu0 %v1236
        %1322 = vmatprep.subr.mxu0 %v1239
        %1323 = vmatpush1.msra.mxu0 %v1238
        %1324 = vmatprep.subr.mxu0 %v1241
        %1325 = vmatpush1.msra.mxu0 %v1240
        %1326 = vmatprep.subr.mxu0 %v1243
        %1327 = vmatpush1.msra.mxu0 %v1242
        %1328 = vmatprep.subr.mxu0 %v1245
        %1329 = vmatpush1.msra.mxu0 %v1244
        %1330 = vmatprep.subr.mxu0 %v1247
        %1331 = vmatpush1.msra.mxu0 %v1246
        %1332 = vmatprep.subr.mxu0 %v1249
        %1333 = vmatpush1.msra.mxu0 %v1248
        %1334 = vmatprep.subr.mxu0 %v1251
        %1335 = vmatpush1.msra.mxu0 %v1250
        %1336 = vmatprep.subr.mxu0 %v1253
        %1337 = vmatpush1.msra.mxu0 %v1252
        %1338 = vmatprep.subr.mxu0 %v1255
        %1339 = vmatpush1.msra.mxu0 %v1254
        %1340 = vmatprep.subr.mxu0 %v1257
        %1341 = vmatpush1.msra.mxu0 %v1256
        %1342 = vmatprep.subr.mxu0 %v1259
        %1343 = vmatpush1.msra.mxu0 %v1258
        %1344 = vmatprep.subr.mxu0 %v1261
        %1345 = vmatpush1.msra.mxu0 %v1260
        %1346 = vmatprep.subr.mxu0 %v1263
        %1347 = vmatpush1.msra.mxu0 %v1262
        %1348 = vmatprep.subr.mxu0 %v1265
        %1349 = vmatpush1.msra.mxu0 %v1264
        %1350 = vmatprep.subr.mxu0 %v1267
        %1351 = vmatpush1.msra.mxu0 %v1266
        %1352 = vmatprep.subr.mxu0 %v1269
        %1353 = vmatpush1.msra.mxu0 %v1268
        %1354 = vmatprep.subr.mxu0 %v1271
        %1355 = vmatpush1.msra.mxu0 %v1270
        %1356 = vmatprep.subr.mxu0 %v1273
        %1357 = vmatpush1.msra.mxu0 %v1272
        %1358 = vmatprep.mubr.f32.mxu0 %v1285
        %1359 = vmatmul.mubr.f32.gmra.mrb[0].mxu0 %v1282
        %v1360 = vpop.f32.mrb[0].mxu0
        %v1361 = vadd.f32 0.0, %v1360
        %v1362 = vpop.f32.mrb[0].mxu0
        %v1363 = vadd.f32 0.0, %v1362
        %1364 = vmatprep.mubr.f32.mxu0 %v1289
        %1365 = vmatmul.mubr.f32.gmra.mrb[0].mxu0 %v1287
        %v1366 = vpop.f32.mrb[0].mxu0
        %v1367 = vadd.f32 0.0, %v1366
        %v1368 = vpop.f32.mrb[0].mxu0
        %v1369 = vadd.f32 0.0, %v1368
        %1370 = vdwg.mxu0
        %v1371 = vadd.f32 %v1193, %v1361
        %v1372 = vadd.f32 %v1195, %v1363
        %v1373 = vadd.f32 %v1199, %v1367
        %v1374 = vadd.f32 %v1201, %v1369
        %v1375 = vld [vmem:[%s4] sm:$0x3]
        %v1377 = vlaneseq
        %v1378 = vshrl.u32 %v1377, 7
        %v1379 = vsub.s32 0, %v1378
        %v1380 = vrot.slane %v1375, %v1379
        %v1381 = vlaneseq
        %v1382 = vshrl.u32 %v1381, 7
        %v1383 = vsub.s32 1, %v1382
        %v1384 = vrot.slane %v1375, %v1383
        %v1387 = vadd.f32 %v1371, %v1380
        %v1388 = vadd.f32 %v1372, %v1384
        %v1389 = vadd.f32 %v1373, %v1380
        %v1390 = vadd.f32 %v1374, %v1384
        %v1391 = vadd.f32 %v1387, %v1389
        %v1392 = vrot.slane %v1391, 4
        %v1393 = vadd.f32 %v1391, %v1392
        %v1394 = vrot.slane %v1393, 2
        %v1395 = vadd.f32 %v1393, %v1394
        %v1396 = vrot.slane %v1395, 1
        %v1397 = vadd.f32 %v1395, %v1396
        %v1398 = vadd.f32 %v1388, %v1390
        %v1399 = vrot.slane %v1398, 4
        %v1400 = vadd.f32 %v1398, %v1399
        %v1401 = vrot.slane %v1400, 2
        %v1402 = vadd.f32 %v1400, %v1401
        %v1403 = vrot.slane %v1402, 1
        %v1404 = vadd.f32 %v1402, %v1403
        %v1405 = vld [vmem:[%s5] sm:$0xff]
        %v1406 = vld [vmem:[%s5 + $0x8] sm:$0xff]
        %v1407 = vld [vmem:[%s5 + $0x10] sm:$0xff]
        %v1408 = vld [vmem:[%s5 + $0x18] sm:$0xff]
        %v1409 = vld [vmem:[%s5 + $0x20] sm:$0xff]
        %v1410 = vld [vmem:[%s5 + $0x28] sm:$0xff]
        %v1411 = vld [vmem:[%s5 + $0x30] sm:$0xff]
        %v1412 = vld [vmem:[%s5 + $0x38] sm:$0xff]
        %v1413 = vld [vmem:[%s5 + $0x40] sm:$0xff]
        %v1414 = vld [vmem:[%s5 + $0x48] sm:$0xff]
        %v1415 = vld [vmem:[%s5 + $0x50] sm:$0xff]
        %v1416 = vld [vmem:[%s5 + $0x58] sm:$0xff]
        %v1417 = vld [vmem:[%s5 + $0x60] sm:$0xff]
        %v1418 = vld [vmem:[%s5 + $0x68] sm:$0xff]
        %v1419 = vld [vmem:[%s5 + $0x70] sm:$0xff]
        %v1420 = vld [vmem:[%s5 + $0x78] sm:$0xff]
        %v1421 = vld [vmem:[%s5 + $0x80] sm:$0xff]
        %v1422 = vld [vmem:[%s5 + $0x88] sm:$0xff]
        %v1423 = vld [vmem:[%s5 + $0x90] sm:$0xff]
        %v1424 = vld [vmem:[%s5 + $0x98] sm:$0xff]
        %v1425 = vld [vmem:[%s5 + $0xa0] sm:$0xff]
        %v1426 = vld [vmem:[%s5 + $0xa8] sm:$0xff]
        %v1427 = vld [vmem:[%s5 + $0xb0] sm:$0xff]
        %v1428 = vld [vmem:[%s5 + $0xb8] sm:$0xff]
        %v1429 = vld [vmem:[%s5 + $0xc0] sm:$0xff]
        %v1430 = vld [vmem:[%s5 + $0xc8] sm:$0xff]
        %v1431 = vld [vmem:[%s5 + $0xd0] sm:$0xff]
        %v1432 = vld [vmem:[%s5 + $0xd8] sm:$0xff]
        %v1433 = vld [vmem:[%s5 + $0xe0] sm:$0xff]
        %v1434 = vld [vmem:[%s5 + $0xe8] sm:$0xff]
        %v1435 = vld [vmem:[%s5 + $0xf0] sm:$0xff]
        %v1436 = vld [vmem:[%s5 + $0xf8] sm:$0xff]
        %v1437 = vld [vmem:[%s6] sm:$0x1]
        %1438 = vmatprep.subr.mxu0 0.0
        %1439 = vmatpush1.msra.mxu0 %v1405
        %1440 = vmatprep.subr.mxu0 0.0
        %1441 = vmatpush1.msra.mxu0 %v1406
        %1442 = vmatprep.subr.mxu0 0.0
        %1443 = vmatpush1.msra.mxu0 %v1407
        %1444 = vmatprep.subr.mxu0 0.0
        %1445 = vmatpush1.msra.mxu0 %v1408
        %1446 = vmatprep.subr.mxu0 0.0
        %1447 = vmatpush1.msra.mxu0 %v1409
        %1448 = vmatprep.subr.mxu0 0.0
        %1449 = vmatpush1.msra.mxu0 %v1410
        %1450 = vmatprep.subr.mxu0 0.0
        %1451 = vmatpush1.msra.mxu0 %v1411
        %1452 = vmatprep.subr.mxu0 0.0
        %1453 = vmatpush1.msra.mxu0 %v1412
        %1454 = vmatprep.subr.mxu0 0.0
        %1455 = vmatpush1.msra.mxu0 %v1413
        %1456 = vmatprep.subr.mxu0 0.0
        %1457 = vmatpush1.msra.mxu0 %v1414
        %1458 = vmatprep.subr.mxu0 0.0
        %1459 = vmatpush1.msra.mxu0 %v1415
        %1460 = vmatprep.subr.mxu0 0.0
        %1461 = vmatpush1.msra.mxu0 %v1416
        %1462 = vmatprep.subr.mxu0 0.0
        %1463 = vmatpush1.msra.mxu0 %v1417
        %1464 = vmatprep.subr.mxu0 0.0
        %1465 = vmatpush1.msra.mxu0 %v1418
        %1466 = vmatprep.subr.mxu0 0.0
        %1467 = vmatpush1.msra.mxu0 %v1419
        %1468 = vmatprep.subr.mxu0 0.0
        %1469 = vmatpush1.msra.mxu0 %v1420
        %1470 = vmatprep.subr.mxu0 0.0
        %1471 = vmatpush1.msra.mxu0 %v1421
        %1472 = vmatprep.subr.mxu0 0.0
        %1473 = vmatpush1.msra.mxu0 %v1422
        %1474 = vmatprep.subr.mxu0 0.0
        %1475 = vmatpush1.msra.mxu0 %v1423
        %1476 = vmatprep.subr.mxu0 0.0
        %1477 = vmatpush1.msra.mxu0 %v1424
        %1478 = vmatprep.subr.mxu0 0.0
        %1479 = vmatpush1.msra.mxu0 %v1425
        %1480 = vmatprep.subr.mxu0 0.0
        %1481 = vmatpush1.msra.mxu0 %v1426
        %1482 = vmatprep.subr.mxu0 0.0
        %1483 = vmatpush1.msra.mxu0 %v1427
        %1484 = vmatprep.subr.mxu0 0.0
        %1485 = vmatpush1.msra.mxu0 %v1428
        %1486 = vmatprep.subr.mxu0 0.0
        %1487 = vmatpush1.msra.mxu0 %v1429
        %1488 = vmatprep.subr.mxu0 0.0
        %1489 = vmatpush1.msra.mxu0 %v1430
        %1490 = vmatprep.subr.mxu0 0.0
        %1491 = vmatpush1.msra.mxu0 %v1431
        %1492 = vmatprep.subr.mxu0 0.0
        %1493 = vmatpush1.msra.mxu0 %v1432
        %1494 = vmatprep.subr.mxu0 0.0
        %1495 = vmatpush1.msra.mxu0 %v1433
        %1496 = vmatprep.subr.mxu0 0.0
        %1497 = vmatpush1.msra.mxu0 %v1434
        %1498 = vmatprep.subr.mxu0 0.0
        %1499 = vmatpush1.msra.mxu0 %v1435
        %1500 = vmatprep.subr.mxu0 0.0
        %1501 = vmatpush1.msra.mxu0 %v1436
        %1502 = vmatprep.mubr.f32.mxu0 %v1404
        %1503 = vmatmul.mubr.f32.gmra.mrb[0].mxu0 %v1397
        %v1504 = vpop.f32.mrb[0].mxu0
        %v1505 = vadd.f32 %v1437, %v1504
        %v1506 = vpop.f32.mrb[0].mxu0
        %1507 = vdwg.mxu0
        %v1508 = vmax.f32 %v1505, 0.0
        %v1509 = vld [vmem:[%s7] sm:$0xff]
        %v1510 = vld [vmem:[%s8] sm:$0x3]
        %v1512 = vcombine.high %v1509, %v1509
        %v1514 = vlaneseq
        %v1515 = vshrl.u32 %v1514, 7
        %v1516 = vsub.s32 0, %v1515
        %v1517 = vrot.slane %v1510, %v1516
        %v1518 = vlaneseq
        %v1519 = vshrl.u32 %v1518, 7
        %v1520 = vsub.s32 1, %v1519
        %v1521 = vrot.slane %v1510, %v1520
        %vm1524 = vcmask 31744
        %v1526 = vsel %vm1524, %v1508, 0
        %vm1528 = vcmask 1043456
        %v1529 = vsel %vm1528, %v1509, 0
        %v1531 = vsel %vm1528, %v1512, 0
        %1533 = vmatprep.subr.mxu0 %v1531
        %1534 = vmatpush1.msra.mxu0 %v1529
        %1535 = vmatprep.subr.mxu0 0.0
        %1536 = vmatpush1.msra.mxu0 0.0
        %1537 = vmatprep.subr.mxu0 0.0
        %1538 = vmatpush1.msra.mxu0 0.0
        %1539 = vmatprep.subr.mxu0 0.0
        %1540 = vmatpush1.msra.mxu0 0.0
        %1541 = vmatprep.subr.mxu0 0.0
        %1542 = vmatpush1.msra.mxu0 0.0
        %1543 = vmatprep.subr.mxu0 0.0
        %1544 = vmatpush1.msra.mxu0 0.0
        %1545 = vmatprep.subr.mxu0 0.0
        %1546 = vmatpush1.msra.mxu0 0.0
        %1547 = vmatprep.subr.mxu0 0.0
        %1548 = vmatpush1.msra.mxu0 0.0
        %1549 = vmatprep.subr.mxu0 0.0
        %1550 = vmatpush1.msra.mxu0 0.0
        %1551 = vmatprep.subr.mxu0 0.0
        %1552 = vmatpush1.msra.mxu0 0.0
        %1553 = vmatprep.subr.mxu0 0.0
        %1554 = vmatpush1.msra.mxu0 0.0
        %1555 = vmatprep.subr.mxu0 0.0
        %1556 = vmatpush1.msra.mxu0 0.0
        %1557 = vmatprep.subr.mxu0 0.0
        %1558 = vmatpush1.msra.mxu0 0.0
        %1559 = vmatprep.subr.mxu0 0.0
        %1560 = vmatpush1.msra.mxu0 0.0
        %1561 = vmatprep.subr.mxu0 0.0
        %1562 = vmatpush1.msra.mxu0 0.0
        %1563 = vmatprep.subr.mxu0 0.0
        %1564 = vmatpush1.msra.mxu0 0.0
        %1565 = vmatprep.subr.mxu0 0.0
        %1566 = vmatpush1.msra.mxu0 0.0
        %1567 = vmatprep.subr.mxu0 0.0
        %1568 = vmatpush1.msra.mxu0 0.0
        %1569 = vmatprep.subr.mxu0 0.0
        %1570 = vmatpush1.msra.mxu0 0.0
        %1571 = vmatprep.subr.mxu0 0.0
        %1572 = vmatpush1.msra.mxu0 0.0
        %1573 = vmatprep.subr.mxu0 0.0
        %1574 = vmatpush1.msra.mxu0 0.0
        %1575 = vmatprep.subr.mxu0 0.0
        %1576 = vmatpush1.msra.mxu0 0.0
        %1577 = vmatprep.subr.mxu0 0.0
        %1578 = vmatpush1.msra.mxu0 0.0
        %1579 = vmatprep.subr.mxu0 0.0
        %1580 = vmatpush1.msra.mxu0 0.0
        %1581 = vmatprep.subr.mxu0 0.0
        %1582 = vmatpush1.msra.mxu0 0.0
        %1583 = vmatprep.subr.mxu0 0.0
        %1584 = vmatpush1.msra.mxu0 0.0
        %1585 = vmatprep.subr.mxu0 0.0
        %1586 = vmatpush1.msra.mxu0 0.0
        %1587 = vmatprep.subr.mxu0 0.0
        %1588 = vmatpush1.msra.mxu0 0.0
        %1589 = vmatprep.subr.mxu0 0.0
        %1590 = vmatpush1.msra.mxu0 0.0
        %1591 = vmatprep.subr.mxu0 0.0
        %1592 = vmatpush1.msra.mxu0 0.0
        %1593 = vmatprep.subr.mxu0 0.0
        %1594 = vmatpush1.msra.mxu0 0.0
        %1595 = vmatprep.subr.mxu0 0.0
        %1596 = vmatpush1.msra.mxu0 0.0
        %1597 = vmatprep.mubr.f32.mxu0 0.0
        %1598 = vmatmul.mubr.f32.gmra.mrb[0].mxu0 %v1526
        %v1599 = vpop.f32.mrb[0].mxu0
        %v1600 = vadd.f32 %v1517, %v1599
        %v1601 = vpop.f32.mrb[0].mxu0
        %v1602 = vadd.f32 %v1521, %v1601
        %1603 = vdwg.mxu0
        %v1604 = vxor.u32 %v1600, 2147483648
        %v1605 = vxor.u32 %v1602, 2147483648
        %v1606 = vmul.f32 %v1604, 1.442695
        %v1607 = vpow.pop %v1606
        %v1608 = vmul.f32 %v1605, 1.442695
        %v1609 = vpow.pop %v1608
        %v1610 = vadd.f32 %v1607, 1.0
        %v1611 = vadd.f32 %v1609, 1.0
        %v1612 = vrcp.pop %v1610
        %v1613 = vmul.f32 1.0, %v1612
        %v1614 = vrcp.pop %v1611
        %v1615 = vmul.f32 1.0, %v1614
        %v1616 = vlaneseq
        %v1617 = vshrl.u32 %v1616, 7
        %v1618 = vsub.s32 0, %v1617
        %v1619 = vrot.slane %v1613, %v1618
        %v1620 = vlaneseq
        %v1621 = vshrl.u32 %v1620, 7
        %v1622 = vsub.s32 0, %v1621
        %v1623 = vrot.slane %v1615, %v1622
        %v1624 = vmul.f32 %v1387, %v1619
        %v1625 = vmul.f32 %v1388, %v1623
        %v1626 = vmul.f32 %v1389, %v1619
        %v1627 = vmul.f32 %v1390, %v1623
        %v1628 = vadd.f32 %v1624, %v371
        %v1629 = vadd.f32 %v1625, %v372
        %v1630 = vadd.f32 %v1626, %v373
        %v1631 = vadd.f32 %v1627, %v374
        %1632 = vst [vmem:[%s369] sm:$0xff] %v1628
        %1633 = vst [vmem:[%s369 + $0x8] sm:$0xff] %v1629
        %1634 = vst [vmem:[%s369 + $0x10] sm:$0xff] %v1630
        %1635 = vst [vmem:[%s369 + $0x18] sm:$0xff] %v1631
        %s1636 = smul.u32 2, %s22
        %p1637 = scmp.lt.s32.totalorder %s1636, 3
        %s1638 = scalar_select %p1637, %s1636, 3
        %s1639 = smul.addr %s1638, 2
        %s1640 = smul.addr %s1639, 8
        %s1641 = scalar_lea.vmem %s9, %s1640
        // Predicated region
        $region65: #{rcab_rgb_pallas.1} parent=55 // pred_check
          %p1642 = pneg %p234
        $region66: #{rcab_rgb_pallas.1} parent=55 // pred_check_branch
          %1644 = sbr.rel (%p1642) target = $region68
        $region67: #{rcab_rgb_pallas.1} parent=55 // pred_region
          %s1645 = smul.u32 2, %s22
        $region68: #{rcab_rgb_pallas.1} parent=55 // pred_fallthru
          _
      $region56: #{rcab_rgb_pallas.1} parent=5 // pred_fallthru
        _
      %p1646 = scmp.le.s32.totalorder 2, %s17
      // Predicated region
      $region69: #{rcab_rgb_pallas.1} parent=5 // pred_check
        %p1647 = pneg %p1646
      $region70: #{rcab_rgb_pallas.1} parent=5 // pred_check_branch
        %1649 = sbr.rel (%p1647) target = $region72
      $region71: #{rcab_rgb_pallas.1} parent=5 // pred_region
        %s1650 = ssub.s32 %s17, 2
        // Predicated region
        $region73: #{rcab_rgb_pallas.1} parent=71 // pred_check
          %p1651 = pneg %p240
        $region74: #{rcab_rgb_pallas.1} parent=71 // pred_check_branch
          %1653 = sbr.rel (%p1651) target = $region76
        $region75: #{rcab_rgb_pallas.1} parent=71 // pred_region
          %s1654 = smul.u32 2, %s23
          %p1655 = scmp.lt.s32.totalorder %s1654, 3
          %s1656 = scalar_select %p1655, %s1654, 3
          %s1657 = smul.addr %s1656, 2
          %s1658 = smul.addr %s1657, 8
          %s1659 = scalar_lea.vmem %s9, %s1658
        $region76: #{rcab_rgb_pallas.1} parent=71 // pred_fallthru
          _
      $region72: #{rcab_rgb_pallas.1} parent=5 // pred_fallthru
        _
    $region6: #{rcab_rgb_pallas.1} parent=1 // loop_footer
      %s21 = sadd.s32 1, %s17
    $region7: #{rcab_rgb_pallas.1} parent=1 // loop_footer_branch
      %16 = sbr.rel target = $region3
    $region8: #{rcab_rgb_pallas.1} parent=1 // loop_exit
      _
    %1660 = vsyncpa [#allocation4], 1
    %s1661 = scalar_lea.sflag [#allocation4], 1
    %1662 = vsyncpa %s1661, 1
    %1663 = vsyncpa [#allocation6], 1

</llo_original>
